<compile_context>
chip_gen: v7x
topology: tpu7x:2x2x1
jax: 0.10.0
libtpu: 0.0.40
codegen_flags: <defaults>
</compile_context>

<pallas_src>
import jax
import jax.numpy as jnp
from jax.experimental import pallas as pl
from jax.experimental.pallas import tpu as pltpu

_LANE = 128
_HIGHEST = jax.lax.Precision.HIGHEST


# ---------------------------------------------------------------------------
# Kernel
# ---------------------------------------------------------------------------
def _mlp_kernel(p_ref, x_ref, o_ref):
    """p_ref: (48,128) packed params; x_ref: (1,TB); o_ref: (1,TB)."""
    x = x_ref[...]                                   # (1, TB)  batch on lanes

    # Static views into the packed parameter slab.
    w2aug = p_ref[0:41, 0:21]                        # (41, 21) [[W2 | b2],[0..0 1]]
    w1aug = p_ref[0:21, 21:23]                       # (21, 2)  [[w1 | b1],[0 1]]
    w3aug = p_ref[0:1, 23:64]                        # (1, 41)  [w3 | b3]

    # Augment x with a ones row so biases ride inside the matmuls.
    xaug = jnp.concatenate([x, jnp.ones_like(x)], axis=0)       # (2, TB)

    # Layer 1 (MXU, K=2).  Row 20 of h1 is exactly 1 (relu(0*x + 1*1)).
    h1 = jnp.maximum(
        jnp.dot(w1aug, xaug, preferred_element_type=jnp.float32,
                precision=_HIGHEST), 0.0)                        # (21, TB)

    # Layer 2 (MXU, K=21; b2 folded via the ones row).  Row 40 of h2 is 1.
    h2 = jnp.maximum(
        jnp.dot(w2aug, h1, preferred_element_type=jnp.float32,
                precision=_HIGHEST), 0.0)                        # (41, TB)

    # Layer 3 (MXU, M=1, K=41; b3 folded via the ones row).
    out = jnp.dot(w3aug, h2, preferred_element_type=jnp.float32,
                  precision=_HIGHEST)                            # (1, TB)

    o_ref[...] = out.astype(o_ref.dtype)             # lane-dense store


# ---------------------------------------------------------------------------
# Parameter packing / init (PyTorch Linear conventions: W (out,in), b (out,))
# ---------------------------------------------------------------------------
def pack_params(w1, b1, w2, b2, w3, b3):
    """Pack all six tensors (augmented) into one (48, 128) f32 slab."""
    slab = jnp.zeros((48, 128), jnp.float32)
    # W2aug (41, 21): rows 0..39 = [W2 | b2], row 40 = [0,...,0, 1]
    slab = slab.at[0:40, 0:20].set(w2.astype(jnp.float32))
    slab = slab.at[0:40, 20].set(b2.astype(jnp.float32))
    slab = slab.at[40, 20].set(1.0)
    # W1aug (21, 2): rows 0..19 = [w1 | b1], row 20 = [0, 1]
    slab = slab.at[0:20, 21].set(w1[:, 0].astype(jnp.float32))
    slab = slab.at[0:20, 22].set(b1.astype(jnp.float32))
    slab = slab.at[20, 22].set(1.0)
    # W3aug (1, 41): [w3 | b3]   (cols 23..63)
    slab = slab.at[0, 23:63].set(w3[0, :].astype(jnp.float32))
    slab = slab.at[0, 63].set(b3.reshape(()).astype(jnp.float32))
    return slab


def init_params(key):
    """Same shapes as the PyTorch module: Linear(1,20), Linear(20,40), Linear(40,1).

    The module's extra scalar `self.bias` Parameter is unused in forward and is
    therefore not part of the kernel.
    """
    k1, k2, k3, k4, k5, k6 = jax.random.split(key, 6)

    def lin(kw, kb, fan_in, fan_out):
        bound = 1.0 / jnp.sqrt(jnp.float32(fan_in))
        w = jax.random.uniform(kw, (fan_out, fan_in), jnp.float32, -bound, bound)
        b = jax.random.uniform(kb, (fan_out,), jnp.float32, -bound, bound)
        return w, b

    w1, b1 = lin(k1, k2, 1, 20)
    w2, b2 = lin(k3, k4, 20, 40)
    w3, b3 = lin(k5, k6, 40, 1)
    return w1, b1, w2, b2, w3, b3


# ---------------------------------------------------------------------------
# Wrapper: (B,1) -> (1, padded B) -> kernel -> (B,1)
# ---------------------------------------------------------------------------
def regression_model_forward(x, packed_params, *, tile_b=2048):
    """x: (batch, 1) f32 -> (batch, 1) f32, matching RegressionModel.forward."""
    batch = x.shape[0]

    # Tile sizing: lane-aligned tiles, big by default, even count when possible
    # so v7x's two TensorCores both get work (no-op on v5e/v6e).
    n_blocks = pl.cdiv(batch, _LANE)                       # 128-lane blocks
    blocks_per_tile = max(1, min(tile_b // _LANE, n_blocks))
    num_tiles = pl.cdiv(n_blocks, blocks_per_tile)
    if num_tiles == 1 and n_blocks >= 2:
        blocks_per_tile = pl.cdiv(n_blocks, 2)
        num_tiles = pl.cdiv(n_blocks, blocks_per_tile)
    elif num_tiles > 1 and num_tiles % 2 == 1:
        blocks_per_tile = pl.cdiv(n_blocks, num_tiles + 1)
        num_tiles = pl.cdiv(n_blocks, blocks_per_tile)
    tb = blocks_per_tile * _LANE
    padded = num_tiles * tb

    xf = x[:, 0].astype(jnp.float32)
    if padded == batch:
        xt = xf.reshape(1, padded)                         # free reshape, no copy
    else:
        xt = jnp.zeros((1, padded), jnp.float32).at[0, :batch].set(xf)

    out_t = pl.pallas_call(
        _mlp_kernel,
        out_shape=jax.ShapeDtypeStruct((1, padded), jnp.float32),
        grid_spec=pltpu.PrefetchScalarGridSpec(
            num_scalar_prefetch=0,
            grid=(num_tiles,),
            in_specs=[
                # Parameter slab: constant block index -> stays resident.
                pl.BlockSpec((48, 128), lambda i: (0, 0)),
                # Input batch tile, lane-dense.
                pl.BlockSpec((1, tb), lambda i: (0, i)),
            ],
            out_specs=pl.BlockSpec((1, tb), lambda i: (0, i)),
        ),
        compiler_params=pltpu.CompilerParams(
            dimension_semantics=("parallel",),   # v7x: split tiles across 2 TCs
        ),
    )(packed_params, xt)

    if padded == batch:
        return out_t.reshape(batch, 1)                     # free reshape
    return out_t[0, :batch][:, None]


# Pure-JAX reference of RegressionModel.forward (torch conventions).
def reference_forward(x, w1, b1, w2, b2, w3, b3):
    h1 = jnp.maximum(x @ w1.T + b1, 0.0)
    h2 = jnp.maximum(h1 @ w2.T + b2, 0.0)
    return h2 @ w3.T + b3


# TODO(synk): get_loss / train are host-side training utilities (Adam loop,
# DataLoader); only the forward pass is implemented as a Pallas kernel.

if __name__ == "__main__":
    key = jax.random.PRNGKey(0)
    kx, kp = jax.random.split(key)

    batch = 8
    # x in [-2pi, 2pi], shape (batch, 1), float32 — same as the sin-regression task.
    x = jax.random.uniform(kx, (batch, 1), jnp.float32,
                           -2.0 * jnp.pi, 2.0 * jnp.pi)
    params = init_params(kp)
    packed = pack_params(*params)

    out = regression_model_forward(x, packed)
    out = jax.block_until_ready(out)

    ref = reference_forward(x, *params)
    assert out.shape == (batch, 1), out.shape
    assert jnp.allclose(out, ref, atol=1e-5, rtol=1e-5), (
        jnp.max(jnp.abs(out - ref)))

    print("KERNEL_OK")
</pallas_src>

<mosaic_0001>
module attributes {stable_mosaic.version = 11 : i64} {
  func.func @_mlp_kernel(%arg0: i32, %arg1: memref<48x128xf32, #tpu.memory_space<vmem>>, %arg2: memref<1x128xf32, #tpu.memory_space<vmem>>, %arg3: memref<1x128xf32, #tpu.memory_space<vmem>>) attributes {dimension_semantics = [#tpu.dimension_semantics<parallel>], iteration_bounds = array<i64: 1>, scalar_prefetch = 0 : i64, scratch_operands = 0 : i64, tpu.core_type = #tpu.core_type<tc>, window_params = [{pipeline_mode = #tpu.pipeline_mode<synchronous>, transform_indices = @transform_0, window_bounds = array<i64: 48, 128>}, {transform_indices = @transform_1, window_bounds = array<i64: 1, 128>}, {transform_indices = @transform_2, window_bounds = array<i64: 1, 128>}]} {
    %c0 = arith.constant 0 : index
    %c0_0 = arith.constant 0 : index
    %0 = vector.load %arg2[%c0, %c0_0] : memref<1x128xf32, #tpu.memory_space<vmem>>, vector<1x128xf32>
    %c0_1 = arith.constant 0 : index
    %c0_2 = arith.constant 0 : index
    %1 = vector.load %arg1[%c0_1, %c0_2] : memref<48x128xf32, #tpu.memory_space<vmem>>, vector<41x21xf32>
    %c0_3 = arith.constant 0 : index
    %c21 = arith.constant 21 : index
    %2 = vector.load %arg1[%c0_3, %c21] : memref<48x128xf32, #tpu.memory_space<vmem>>, vector<21x2xf32>
    %c0_4 = arith.constant 0 : index
    %c23 = arith.constant 23 : index
    %3 = vector.load %arg1[%c0_4, %c23] : memref<48x128xf32, #tpu.memory_space<vmem>>, vector<1x41xf32>
    %cst = arith.constant 1.000000e+00 : f32
    %4 = vector.broadcast %cst : f32 to vector<1x128xf32>
    %5 = tpu.concatenate %0, %4 in 0 : vector<1x128xf32>, vector<1x128xf32> -> vector<2x128xf32>
    %cst_5 = arith.constant dense<0.000000e+00> : vector<21x128xf32>
    %6 = tpu.matmul %2, %5, %cst_5 {dimension_numbers = #tpu.dot_dimension_numbers<[1], [0], [0], [1], [0, 0, 1, 1], [], []>, precision = #tpu.contract_precision<fp32>} : vector<21x2xf32>, vector<2x128xf32>, vector<21x128xf32> -> vector<21x128xf32>
    %cst_6 = arith.constant 0.000000e+00 : f32
    %7 = vector.broadcast %cst_6 : f32 to vector<21x128xf32>
    %8 = arith.maximumf %6, %7 : vector<21x128xf32>
    %cst_7 = arith.constant dense<0.000000e+00> : vector<41x128xf32>
    %9 = tpu.matmul %1, %8, %cst_7 {dimension_numbers = #tpu.dot_dimension_numbers<[1], [0], [0], [1], [0, 0, 1, 1], [], []>, precision = #tpu.contract_precision<fp32>} : vector<41x21xf32>, vector<21x128xf32>, vector<41x128xf32> -> vector<41x128xf32>
    %cst_8 = arith.constant 0.000000e+00 : f32
    %10 = vector.broadcast %cst_8 : f32 to vector<41x128xf32>
    %11 = arith.maximumf %9, %10 : vector<41x128xf32>
    %cst_9 = arith.constant dense<0.000000e+00> : vector<1x128xf32>
    %12 = tpu.matmul %3, %11, %cst_9 {dimension_numbers = #tpu.dot_dimension_numbers<[1], [0], [0], [1], [0, 0, 1, 1], [], []>, precision = #tpu.contract_precision<fp32>} : vector<1x41xf32>, vector<41x128xf32>, vector<1x128xf32> -> vector<1x128xf32>
    %c0_10 = arith.constant 0 : index
    %c0_11 = arith.constant 0 : index
    %13 = vector.load %arg3[%c0_10, %c0_11] : memref<1x128xf32, #tpu.memory_space<vmem>>, vector<1x128xf32>
    tpu.vector_store %arg3[%c0_10, %c0_11], %12 {strides = array<i32>} : memref<1x128xf32, #tpu.memory_space<vmem>>, vector<1x128xf32>,
    return
  }
  func.func @transform_0(%arg0: i32) -> (i32, i32) {
    %c0_i32 = arith.constant 0 : i32
    %c0_i32_0 = arith.constant 0 : i32
    %c0_i32_1 = arith.constant 0 : i32
    return %c0_i32, %c0_i32_0 : i32, i32
  }
  func.func @transform_1(%arg0: i32) -> (i32, i32) {
    %c0_i32 = arith.constant 0 : i32
    %c0_i32_0 = arith.constant 0 : i32
    return %c0_i32, %arg0 : i32, i32
  }
  func.func @transform_2(%arg0: i32) -> (i32, i32) {
    %c0_i32 = arith.constant 0 : i32
    %c0_i32_0 = arith.constant 0 : i32
    return %c0_i32, %arg0 : i32, i32
  }
}

</mosaic_0001>

<llo_original>
// kernel: tpu_custom_call.1
$region0: #{tpu_custom_call.1}
  #allocation0 [shape = 'u32[]', space=smem, size = 0x4, offset = 0x4, fixed_abs, tag = 'smem constant byte address 0x4 - core index']
  #allocation1 [shape = 'u32[144,128]{1,0:T(1,128)}', space=vmem, size = 0x12000, scoped, tag = 'internal scratch']
  %s0 = inlined_call_operand.hbm [shape: f32[48,128], index: 0, kind: input, shape index: {}]
  %s1 = inlined_call_operand.vmem [shape: f32[1,128], index: 1, kind: input, shape index: {}]
  %s2 = inlined_call_operand.hbm [shape: f32[1,128], index: 2, kind: output, shape index: {}]
  %s3 = sld [smem:[#allocation0]]
  $region22: #{tpu_custom_call.1} parent=0
    _
  %s5 = ssub.s32 1, %s3
  %s6 = scalar_select 0, %s5, %s3
  $region1: #{tpu_custom_call.1} parent=0
    #allocation2 [shape = 'u8[24576]{0}', space=vmem, size = 0x6000, scoped, tag = 'input window, operand 0, single buffered']
    #allocation3 [shape = 's32[1]{0}', space=sflag, size = 0x4, scoped, tag = 'scoped memory for tpu_custom_call.1']
    #allocation4 [shape = 's32[1]{0}', space=sflag, size = 0x4, scoped, tag = 'scoped memory for tpu_custom_call.1']
    #allocation5 [shape = 'u8[512]{0}', space=vmem, size = 0x400, scoped, tag = 'output window, operand 0, single buffered']
    %7 = vsyncpa [#allocation3], 0
    %8 = vsyncpa [#allocation4], 0
    // Predicated region
    $region2: #{tpu_custom_call.1} parent=1 // pred_check
      _
    $region3: #{tpu_custom_call.1} parent=1 // pred_check_branch
      %10 = sbr.rel (0) target = $region5
    $region4: #{tpu_custom_call.1} parent=1 // pred_region
      %s12 = ssub.s32 768, 768
      %13 = vsyncadd [#allocation3], %s12
      %s14 = sshll.u32 [#allocation2], 4
      %s15 = int_to_ptr.vmem [resolvable:$true] %s14
      %20 = dma.hbm_to_vmem [thread:$0]  %s0, 768, %s15, [#allocation3], 128, 128, 8
    $region5: #{tpu_custom_call.1} parent=1 // pred_fallthru
      _
    // Predicated region
    $region6: #{tpu_custom_call.1} parent=1 // pred_check
      _
    $region7: #{tpu_custom_call.1} parent=1 // pred_check_branch
      %22 = sbr.rel (0) target = $region9
    $region8: #{tpu_custom_call.1} parent=1 // pred_region
      _
    $region9: #{tpu_custom_call.1} parent=1 // pred_fallthru
      _
    // Predicated region
    $region10: #{tpu_custom_call.1} parent=1 // pred_check
      _
    $region11: #{tpu_custom_call.1} parent=1 // pred_check_branch
      %24 = sbr.rel (0) target = $region13
    $region12: #{tpu_custom_call.1} parent=1 // pred_region
      %25 = dma.done [#allocation3], 768
    $region13: #{tpu_custom_call.1} parent=1 // pred_fallthru
      _
    %v26 = vld [vmem:[%s1] sm:$0x1]
    %v27 = vld [vmem:[#allocation2] sm:$0xff]
    %v28 = vld [vmem:[#allocation2 + $0x8] sm:$0xff]
    %v29 = vld [vmem:[#allocation2 + $0x10] sm:$0xff]
    %v30 = vld [vmem:[#allocation2 + $0x18] sm:$0xff]
    %v31 = vld [vmem:[#allocation2 + $0x20] sm:$0xff]
    %v32 = vld [vmem:[#allocation2 + $0x28] sm:$0x1]
    %v33 = vld [vmem:[#allocation2 + $0x10] sm:$0x1f]
    %v34 = vld [vmem:[#allocation2] sm:$0x1]
    %vm35 = vcmask 1040384
    %v36 = vsel %vm35, %v26, 1.0
    %40 = vrot.lane.b32.xlu0 %v27, 107
    %v41 = vpop.permute.xlu0 %40
    %42 = vrot.lane.b32.xlu0 %v28, 107
    %v43 = vpop.permute.xlu0 %42
    %44 = vrot.lane.b32.xlu0 %v33, 107
    %v45 = vpop.permute.xlu0 %44
    %vm46 = vcmask 15360
    %v47 = vsel %vm46, %v41, 0
    %v49 = vsel %vm46, %v43, 0
    %v51 = vsel %vm46, %v45, 0
    %vm53 = vcmask 1041408
    %v55 = vsel %vm53, %v36, 0
    %57 = vmatprep.subr.mxu0 0.0
    %v58 = vand.u32 %v55, 4294901760
    %59 = vmatpush1.msra.mxu0 %v58
    %60 = vmatprep.subr.mxu0 0.0
    %61 = vmatpush1.msra.mxu0 0.0
    %62 = vmatprep.subr.mxu0 0.0
    %63 = vmatpush1.msra.mxu0 0.0
    %64 = vmatprep.subr.mxu0 0.0
    %65 = vmatpush1.msra.mxu0 0.0
    %66 = vmatprep.subr.mxu0 0.0
    %67 = vmatpush1.msra.mxu0 0.0
    %68 = vmatprep.subr.mxu0 0.0
    %69 = vmatpush1.msra.mxu0 0.0
    %70 = vmatprep.subr.mxu0 0.0
    %71 = vmatpush1.msra.mxu0 0.0
    %72 = vmatprep.subr.mxu0 0.0
    %73 = vmatpush1.msra.mxu0 0.0
    %74 = vmatprep.subr.mxu0 0.0
    %75 = vmatpush1.msra.mxu0 0.0
    %76 = vmatprep.subr.mxu0 0.0
    %77 = vmatpush1.msra.mxu0 0.0
    %78 = vmatprep.subr.mxu0 0.0
    %79 = vmatpush1.msra.mxu0 0.0
    %80 = vmatprep.subr.mxu0 0.0
    %81 = vmatpush1.msra.mxu0 0.0
    %82 = vmatprep.subr.mxu0 0.0
    %83 = vmatpush1.msra.mxu0 0.0
    %84 = vmatprep.subr.mxu0 0.0
    %85 = vmatpush1.msra.mxu0 0.0
    %86 = vmatprep.subr.mxu0 0.0
    %87 = vmatpush1.msra.mxu0 0.0
    %88 = vmatprep.subr.mxu0 0.0
    %89 = vmatpush1.msra.mxu0 0.0
    %90 = vmatprep.subr.mxu0 0.0
    %91 = vmatpush1.msra.mxu0 0.0
    %92 = vmatprep.subr.mxu0 0.0
    %93 = vmatpush1.msra.mxu0 0.0
    %94 = vmatprep.subr.mxu0 0.0
    %95 = vmatpush1.msra.mxu0 0.0
    %96 = vmatprep.subr.mxu0 0.0
    %97 = vmatpush1.msra.mxu0 0.0
    %98 = vmatprep.subr.mxu0 0.0
    %99 = vmatpush1.msra.mxu0 0.0
    %100 = vmatprep.subr.mxu0 0.0
    %101 = vmatpush1.msra.mxu0 0.0
    %102 = vmatprep.subr.mxu0 0.0
    %103 = vmatpush1.msra.mxu0 0.0
    %104 = vmatprep.subr.mxu0 0.0
    %105 = vmatpush1.msra.mxu0 0.0
    %106 = vmatprep.subr.mxu0 0.0
    %107 = vmatpush1.msra.mxu0 0.0
    %108 = vmatprep.subr.mxu0 0.0
    %109 = vmatpush1.msra.mxu0 0.0
    %110 = vmatprep.subr.mxu0 0.0
    %111 = vmatpush1.msra.mxu0 0.0
    %112 = vmatprep.subr.mxu0 0.0
    %113 = vmatpush1.msra.mxu0 0.0
    %114 = vmatprep.subr.mxu0 0.0
    %115 = vmatpush1.msra.mxu0 0.0
    %116 = vmatprep.subr.mxu0 0.0
    %117 = vmatpush1.msra.mxu0 0.0
    %118 = vmatprep.subr.mxu0 0.0
    %119 = vmatpush1.msra.mxu0 0.0
    %120 = vmatprep.subr.mxu0 0.0
    %121 = vmatpush1.msra.mxu0 0.0
    %122 = vmatprep.mubr.f32.mxu0 0.0
    %v123 = vand.u32 %v47, 4294901760
    %v124 = vsub.f32 %v47, %v123
    %v125 = vand.u32 %v124, 4294901760
    %v126 = vsub.f32 %v124, %v125
    %v127 = vand.u32 %v126, 4294901760
    %128 = vmatmul.mubr.f32.gmra.mrb[0].mxu0 %v127
    %v129 = vpop.f32.mrb[0].mxu0
    %v130 = vadd.f32 0.0, %v129
    %v131 = vpop.f32.mrb[0].mxu0
    %132 = vmatprep.mubr.f32.mxu0 0.0
    %v133 = vand.u32 %v49, 4294901760
    %v134 = vsub.f32 %v49, %v133
    %v135 = vand.u32 %v134, 4294901760
    %v136 = vsub.f32 %v134, %v135
    %v137 = vand.u32 %v136, 4294901760
    %138 = vmatmul.mubr.f32.gmra.mrb[0].mxu0 %v137
    %v139 = vpop.f32.mrb[0].mxu0
    %v140 = vadd.f32 0.0, %v139
    %v141 = vpop.f32.mrb[0].mxu0
    %142 = vmatprep.mubr.f32.mxu0 0.0
    %v143 = vand.u32 %v51, 4294901760
    %v144 = vsub.f32 %v51, %v143
    %v145 = vand.u32 %v144, 4294901760
    %v146 = vsub.f32 %v144, %v145
    %v147 = vand.u32 %v146, 4294901760
    %148 = vmatmul.mubr.f32.gmra.mrb[0].mxu0 %v147
    %v149 = vpop.f32.mrb[0].mxu0
    %v150 = vadd.f32 0.0, %v149
    %v151 = vpop.f32.mrb[0].mxu0
    %152 = vdwg.mxu0
    %153 = vmatprep.subr.mxu0 0.0
    %v154 = vand.u32 %v55, 4294901760
    %v155 = vsub.f32 %v55, %v154
    %v156 = vand.u32 %v155, 4294901760
    %v157 = vsub.f32 %v155, %v156
    %v158 = vand.u32 %v157, 4294901760
    %159 = vmatpush1.msra.mxu0 %v158
    %160 = vmatprep.subr.mxu0 0.0
    %161 = vmatpush1.msra.mxu0 0.0
    %162 = vmatprep.subr.mxu0 0.0
    %163 = vmatpush1.msra.mxu0 0.0
    %164 = vmatprep.subr.mxu0 0.0
    %165 = vmatpush1.msra.mxu0 0.0
    %166 = vmatprep.subr.mxu0 0.0
    %167 = vmatpush1.msra.mxu0 0.0
    %168 = vmatprep.subr.mxu0 0.0
    %169 = vmatpush1.msra.mxu0 0.0
    %170 = vmatprep.subr.mxu0 0.0
    %171 = vmatpush1.msra.mxu0 0.0
    %172 = vmatprep.subr.mxu0 0.0
    %173 = vmatpush1.msra.mxu0 0.0
    %174 = vmatprep.subr.mxu0 0.0
    %175 = vmatpush1.msra.mxu0 0.0
    %176 = vmatprep.subr.mxu0 0.0
    %177 = vmatpush1.msra.mxu0 0.0
    %178 = vmatprep.subr.mxu0 0.0
    %179 = vmatpush1.msra.mxu0 0.0
    %180 = vmatprep.subr.mxu0 0.0
    %181 = vmatpush1.msra.mxu0 0.0
    %182 = vmatprep.subr.mxu0 0.0
    %183 = vmatpush1.msra.mxu0 0.0
    %184 = vmatprep.subr.mxu0 0.0
    %185 = vmatpush1.msra.mxu0 0.0
    %186 = vmatprep.subr.mxu0 0.0
    %187 = vmatpush1.msra.mxu0 0.0
    %188 = vmatprep.subr.mxu0 0.0
    %189 = vmatpush1.msra.mxu0 0.0
    %190 = vmatprep.subr.mxu0 0.0
    %191 = vmatpush1.msra.mxu0 0.0
    %192 = vmatprep.subr.mxu0 0.0
    %193 = vmatpush1.msra.mxu0 0.0
    %194 = vmatprep.subr.mxu0 0.0
    %195 = vmatpush1.msra.mxu0 0.0
    %196 = vmatprep.subr.mxu0 0.0
    %197 = vmatpush1.msra.mxu0 0.0
    %198 = vmatprep.subr.mxu0 0.0
    %199 = vmatpush1.msra.mxu0 0.0
    %200 = vmatprep.subr.mxu0 0.0
    %201 = vmatpush1.msra.mxu0 0.0
    %202 = vmatprep.subr.mxu0 0.0
    %203 = vmatpush1.msra.mxu0 0.0
    %204 = vmatprep.subr.mxu0 0.0
    %205 = vmatpush1.msra.mxu0 0.0
    %206 = vmatprep.subr.mxu0 0.0
    %207 = vmatpush1.msra.mxu0 0.0
    %208 = vmatprep.subr.mxu0 0.0
    %209 = vmatpush1.msra.mxu0 0.0
    %210 = vmatprep.subr.mxu0 0.0
    %211 = vmatpush1.msra.mxu0 0.0
    %212 = vmatprep.subr.mxu0 0.0
    %213 = vmatpush1.msra.mxu0 0.0
    %214 = vmatprep.subr.mxu0 0.0
    %215 = vmatpush1.msra.mxu0 0.0
    %216 = vmatprep.subr.mxu0 0.0
    %217 = vmatpush1.msra.mxu0 0.0
    %218 = vmatprep.subr.mxu0 0.0
    %219 = vmatpush1.msra.mxu0 0.0
    %220 = vmatprep.subr.mxu0 0.0
    %221 = vmatpush1.msra.mxu0 0.0
    %222 = vmatprep.mubr.f32.mxu0 0.0
    %v223 = vand.u32 %v47, 4294901760
    %224 = vmatmul.mubr.f32.gmra.mrb[0].mxu0 %v223
    %v225 = vpop.f32.mrb[0].mxu0
    %v226 = vadd.f32 %v130, %v225
    %v227 = vpop.f32.mrb[0].mxu0
    %228 = vmatprep.mubr.f32.mxu0 0.0
    %v229 = vand.u32 %v49, 4294901760
    %230 = vmatmul.mubr.f32.gmra.mrb[0].mxu0 %v229
    %v231 = vpop.f32.mrb[0].mxu0
    %v232 = vadd.f32 %v140, %v231
    %v233 = vpop.f32.mrb[0].mxu0
    %234 = vmatprep.mubr.f32.mxu0 0.0
    %v235 = vand.u32 %v51, 4294901760
    %236 = vmatmul.mubr.f32.gmra.mrb[0].mxu0 %v235
    %v237 = vpop.f32.mrb[0].mxu0
    %v238 = vadd.f32 %v150, %v237
    %v239 = vpop.f32.mrb[0].mxu0
    %240 = vdwg.mxu0
    %241 = vmatprep.subr.mxu0 0.0
    %v242 = vand.u32 %v55, 4294901760
    %v243 = vsub.f32 %v55, %v242
    %244 = vmatpush1.msra.mxu0 %v243
    %245 = vmatprep.subr.mxu0 0.0
    %246 = vmatpush1.msra.mxu0 0.0
    %247 = vmatprep.subr.mxu0 0.0
    %248 = vmatpush1.msra.mxu0 0.0
    %249 = vmatprep.subr.mxu0 0.0
    %250 = vmatpush1.msra.mxu0 0.0
    %251 = vmatprep.subr.mxu0 0.0
    %252 = vmatpush1.msra.mxu0 0.0
    %253 = vmatprep.subr.mxu0 0.0
    %254 = vmatpush1.msra.mxu0 0.0
    %255 = vmatprep.subr.mxu0 0.0
    %256 = vmatpush1.msra.mxu0 0.0
    %257 = vmatprep.subr.mxu0 0.0
    %258 = vmatpush1.msra.mxu0 0.0
    %259 = vmatprep.subr.mxu0 0.0
    %260 = vmatpush1.msra.mxu0 0.0
    %261 = vmatprep.subr.mxu0 0.0
    %262 = vmatpush1.msra.mxu0 0.0
    %263 = vmatprep.subr.mxu0 0.0
    %264 = vmatpush1.msra.mxu0 0.0
    %265 = vmatprep.subr.mxu0 0.0
    %266 = vmatpush1.msra.mxu0 0.0
    %267 = vmatprep.subr.mxu0 0.0
    %268 = vmatpush1.msra.mxu0 0.0
    %269 = vmatprep.subr.mxu0 0.0
    %270 = vmatpush1.msra.mxu0 0.0
    %271 = vmatprep.subr.mxu0 0.0
    %272 = vmatpush1.msra.mxu0 0.0
    %273 = vmatprep.subr.mxu0 0.0
    %274 = vmatpush1.msra.mxu0 0.0
    %275 = vmatprep.subr.mxu0 0.0
    %276 = vmatpush1.msra.mxu0 0.0
    %277 = vmatprep.subr.mxu0 0.0
    %278 = vmatpush1.msra.mxu0 0.0
    %279 = vmatprep.subr.mxu0 0.0
    %280 = vmatpush1.msra.mxu0 0.0
    %281 = vmatprep.subr.mxu0 0.0
    %282 = vmatpush1.msra.mxu0 0.0
    %283 = vmatprep.subr.mxu0 0.0
    %284 = vmatpush1.msra.mxu0 0.0
    %285 = vmatprep.subr.mxu0 0.0
    %286 = vmatpush1.msra.mxu0 0.0
    %287 = vmatprep.subr.mxu0 0.0
    %288 = vmatpush1.msra.mxu0 0.0
    %289 = vmatprep.subr.mxu0 0.0
    %290 = vmatpush1.msra.mxu0 0.0
    %291 = vmatprep.subr.mxu0 0.0
    %292 = vmatpush1.msra.mxu0 0.0
    %293 = vmatprep.subr.mxu0 0.0
    %294 = vmatpush1.msra.mxu0 0.0
    %295 = vmatprep.subr.mxu0 0.0
    %296 = vmatpush1.msra.mxu0 0.0
    %297 = vmatprep.subr.mxu0 0.0
    %298 = vmatpush1.msra.mxu0 0.0
    %299 = vmatprep.subr.mxu0 0.0
    %300 = vmatpush1.msra.mxu0 0.0
    %301 = vmatprep.subr.mxu0 0.0
    %302 = vmatpush1.msra.mxu0 0.0
    %303 = vmatprep.subr.mxu0 0.0
    %304 = vmatpush1.msra.mxu0 0.0
    %305 = vmatprep.subr.mxu0 0.0
    %306 = vmatpush1.msra.mxu0 0.0
    %307 = vmatprep.mubr.f32.mxu0 0.0
    %v308 = vand.u32 %v47, 4294901760
    %v309 = vsub.f32 %v47, %v308
    %310 = vmatmul.mubr.f32.gmra.mrb[0].mxu0 %v309
    %v311 = vpop.f32.mrb[0].mxu0
    %v312 = vadd.f32 %v226, %v311
    %v313 = vpop.f32.mrb[0].mxu0
    %314 = vmatprep.mubr.f32.mxu0 0.0
    %v315 = vand.u32 %v49, 4294901760
    %v316 = vsub.f32 %v49, %v315
    %317 = vmatmul.mubr.f32.gmra.mrb[0].mxu0 %v316
    %v318 = vpop.f32.mrb[0].mxu0
    %v319 = vadd.f32 %v232, %v318
    %v320 = vpop.f32.mrb[0].mxu0
    %321 = vmatprep.mubr.f32.mxu0 0.0
    %v322 = vand.u32 %v51, 4294901760
    %v323 = vsub.f32 %v51, %v322
    %324 = vmatmul.mubr.f32.gmra.mrb[0].mxu0 %v323
    %v325 = vpop.f32.mrb[0].mxu0
    %v326 = vadd.f32 %v238, %v325
    %v327 = vpop.f32.mrb[0].mxu0
    %328 = vdwg.mxu0
    %329 = vmatprep.subr.mxu0 0.0
    %v330 = vand.u32 %v55, 4294901760
    %331 = vmatpush1.msra.mxu0 %v330
    %332 = vmatprep.subr.mxu0 0.0
    %333 = vmatpush1.msra.mxu0 0.0
    %334 = vmatprep.subr.mxu0 0.0
    %335 = vmatpush1.msra.mxu0 0.0
    %336 = vmatprep.subr.mxu0 0.0
    %337 = vmatpush1.msra.mxu0 0.0
    %338 = vmatprep.subr.mxu0 0.0
    %339 = vmatpush1.msra.mxu0 0.0
    %340 = vmatprep.subr.mxu0 0.0
    %341 = vmatpush1.msra.mxu0 0.0
    %342 = vmatprep.subr.mxu0 0.0
    %343 = vmatpush1.msra.mxu0 0.0
    %344 = vmatprep.subr.mxu0 0.0
    %345 = vmatpush1.msra.mxu0 0.0
    %346 = vmatprep.subr.mxu0 0.0
    %347 = vmatpush1.msra.mxu0 0.0
    %348 = vmatprep.subr.mxu0 0.0
    %349 = vmatpush1.msra.mxu0 0.0
    %350 = vmatprep.subr.mxu0 0.0
    %351 = vmatpush1.msra.mxu0 0.0
    %352 = vmatprep.subr.mxu0 0.0
    %353 = vmatpush1.msra.mxu0 0.0
    %354 = vmatprep.subr.mxu0 0.0
    %355 = vmatpush1.msra.mxu0 0.0
    %356 = vmatprep.subr.mxu0 0.0
    %357 = vmatpush1.msra.mxu0 0.0
    %358 = vmatprep.subr.mxu0 0.0
    %359 = vmatpush1.msra.mxu0 0.0
    %360 = vmatprep.subr.mxu0 0.0
    %361 = vmatpush1.msra.mxu0 0.0
    %362 = vmatprep.subr.mxu0 0.0
    %363 = vmatpush1.msra.mxu0 0.0
    %364 = vmatprep.subr.mxu0 0.0
    %365 = vmatpush1.msra.mxu0 0.0
    %366 = vmatprep.subr.mxu0 0.0
    %367 = vmatpush1.msra.mxu0 0.0
    %368 = vmatprep.subr.mxu0 0.0
    %369 = vmatpush1.msra.mxu0 0.0
    %370 = vmatprep.subr.mxu0 0.0
    %371 = vmatpush1.msra.mxu0 0.0
    %372 = vmatprep.subr.mxu0 0.0
    %373 = vmatpush1.msra.mxu0 0.0
    %374 = vmatprep.subr.mxu0 0.0
    %375 = vmatpush1.msra.mxu0 0.0
    %376 = vmatprep.subr.mxu0 0.0
    %377 = vmatpush1.msra.mxu0 0.0
    %378 = vmatprep.subr.mxu0 0.0
    %379 = vmatpush1.msra.mxu0 0.0
    %380 = vmatprep.subr.mxu0 0.0
    %381 = vmatpush1.msra.mxu0 0.0
    %382 = vmatprep.subr.mxu0 0.0
    %383 = vmatpush1.msra.mxu0 0.0
    %384 = vmatprep.subr.mxu0 0.0
    %385 = vmatpush1.msra.mxu0 0.0
    %386 = vmatprep.subr.mxu0 0.0
    %387 = vmatpush1.msra.mxu0 0.0
    %388 = vmatprep.subr.mxu0 0.0
    %389 = vmatpush1.msra.mxu0 0.0
    %390 = vmatprep.subr.mxu0 0.0
    %391 = vmatpush1.msra.mxu0 0.0
    %392 = vmatprep.subr.mxu0 0.0
    %393 = vmatpush1.msra.mxu0 0.0
    %394 = vmatprep.mubr.f32.mxu0 0.0
    %v395 = vand.u32 %v47, 4294901760
    %v396 = vsub.f32 %v47, %v395
    %v397 = vand.u32 %v396, 4294901760
    %398 = vmatmul.mubr.f32.gmra.mrb[0].mxu0 %v397
    %v399 = vpop.f32.mrb[0].mxu0
    %v400 = vadd.f32 %v312, %v399
    %v401 = vpop.f32.mrb[0].mxu0
    %402 = vmatprep.mubr.f32.mxu0 0.0
    %v403 = vand.u32 %v49, 4294901760
    %v404 = vsub.f32 %v49, %v403
    %v405 = vand.u32 %v404, 4294901760
    %406 = vmatmul.mubr.f32.gmra.mrb[0].mxu0 %v405
    %v407 = vpop.f32.mrb[0].mxu0
    %v408 = vadd.f32 %v319, %v407
    %v409 = vpop.f32.mrb[0].mxu0
    %410 = vmatprep.mubr.f32.mxu0 0.0
    %v411 = vand.u32 %v51, 4294901760
    %v412 = vsub.f32 %v51, %v411
    %v413 = vand.u32 %v412, 4294901760
    %414 = vmatmul.mubr.f32.gmra.mrb[0].mxu0 %v413
    %v415 = vpop.f32.mrb[0].mxu0
    %v416 = vadd.f32 %v326, %v415
    %v417 = vpop.f32.mrb[0].mxu0
    %418 = vdwg.mxu0
    %419 = vmatprep.subr.mxu0 0.0
    %v420 = vand.u32 %v55, 4294901760
    %v421 = vsub.f32 %v55, %v420
    %v422 = vand.u32 %v421, 4294901760
    %423 = vmatpush1.msra.mxu0 %v422
    %424 = vmatprep.subr.mxu0 0.0
    %425 = vmatpush1.msra.mxu0 0.0
    %426 = vmatprep.subr.mxu0 0.0
    %427 = vmatpush1.msra.mxu0 0.0
    %428 = vmatprep.subr.mxu0 0.0
    %429 = vmatpush1.msra.mxu0 0.0
    %430 = vmatprep.subr.mxu0 0.0
    %431 = vmatpush1.msra.mxu0 0.0
    %432 = vmatprep.subr.mxu0 0.0
    %433 = vmatpush1.msra.mxu0 0.0
    %434 = vmatprep.subr.mxu0 0.0
    %435 = vmatpush1.msra.mxu0 0.0
    %436 = vmatprep.subr.mxu0 0.0
    %437 = vmatpush1.msra.mxu0 0.0
    %438 = vmatprep.subr.mxu0 0.0
    %439 = vmatpush1.msra.mxu0 0.0
    %440 = vmatprep.subr.mxu0 0.0
    %441 = vmatpush1.msra.mxu0 0.0
    %442 = vmatprep.subr.mxu0 0.0
    %443 = vmatpush1.msra.mxu0 0.0
    %444 = vmatprep.subr.mxu0 0.0
    %445 = vmatpush1.msra.mxu0 0.0
    %446 = vmatprep.subr.mxu0 0.0
    %447 = vmatpush1.msra.mxu0 0.0
    %448 = vmatprep.subr.mxu0 0.0
    %449 = vmatpush1.msra.mxu0 0.0
    %450 = vmatprep.subr.mxu0 0.0
    %451 = vmatpush1.msra.mxu0 0.0
    %452 = vmatprep.subr.mxu0 0.0
    %453 = vmatpush1.msra.mxu0 0.0
    %454 = vmatprep.subr.mxu0 0.0
    %455 = vmatpush1.msra.mxu0 0.0
    %456 = vmatprep.subr.mxu0 0.0
    %457 = vmatpush1.msra.mxu0 0.0
    %458 = vmatprep.subr.mxu0 0.0
    %459 = vmatpush1.msra.mxu0 0.0
    %460 = vmatprep.subr.mxu0 0.0
    %461 = vmatpush1.msra.mxu0 0.0
    %462 = vmatprep.subr.mxu0 0.0
    %463 = vmatpush1.msra.mxu0 0.0
    %464 = vmatprep.subr.mxu0 0.0
    %465 = vmatpush1.msra.mxu0 0.0
    %466 = vmatprep.subr.mxu0 0.0
    %467 = vmatpush1.msra.mxu0 0.0
    %468 = vmatprep.subr.mxu0 0.0
    %469 = vmatpush1.msra.mxu0 0.0
    %470 = vmatprep.subr.mxu0 0.0
    %471 = vmatpush1.msra.mxu0 0.0
    %472 = vmatprep.subr.mxu0 0.0
    %473 = vmatpush1.msra.mxu0 0.0
    %474 = vmatprep.subr.mxu0 0.0
    %475 = vmatpush1.msra.mxu0 0.0
    %476 = vmatprep.subr.mxu0 0.0
    %477 = vmatpush1.msra.mxu0 0.0
    %478 = vmatprep.subr.mxu0 0.0
    %479 = vmatpush1.msra.mxu0 0.0
    %480 = vmatprep.subr.mxu0 0.0
    %481 = vmatpush1.msra.mxu0 0.0
    %482 = vmatprep.subr.mxu0 0.0
    %483 = vmatpush1.msra.mxu0 0.0
    %484 = vmatprep.subr.mxu0 0.0
    %485 = vmatpush1.msra.mxu0 0.0
    %486 = vmatprep.mubr.f32.mxu0 0.0
    %v487 = vand.u32 %v47, 4294901760
    %488 = vmatmul.mubr.f32.gmra.mrb[0].mxu0 %v487
    %v489 = vpop.f32.mrb[0].mxu0
    %v490 = vadd.f32 %v400, %v489
    %v491 = vpop.f32.mrb[0].mxu0
    %492 = vmatprep.mubr.f32.mxu0 0.0
    %v493 = vand.u32 %v49, 4294901760
    %494 = vmatmul.mubr.f32.gmra.mrb[0].mxu0 %v493
    %v495 = vpop.f32.mrb[0].mxu0
    %v496 = vadd.f32 %v408, %v495
    %v497 = vpop.f32.mrb[0].mxu0
    %498 = vmatprep.mubr.f32.mxu0 0.0
    %v499 = vand.u32 %v51, 4294901760
    %500 = vmatmul.mubr.f32.gmra.mrb[0].mxu0 %v499
    %v501 = vpop.f32.mrb[0].mxu0
    %v502 = vadd.f32 %v416, %v501
    %v503 = vpop.f32.mrb[0].mxu0
    %504 = vdwg.mxu0
    %505 = vmatprep.subr.mxu0 0.0
    %v506 = vand.u32 %v55, 4294901760
    %507 = vmatpush1.msra.mxu0 %v506
    %508 = vmatprep.subr.mxu0 0.0
    %509 = vmatpush1.msra.mxu0 0.0
    %510 = vmatprep.subr.mxu0 0.0
    %511 = vmatpush1.msra.mxu0 0.0
    %512 = vmatprep.subr.mxu0 0.0
    %513 = vmatpush1.msra.mxu0 0.0
    %514 = vmatprep.subr.mxu0 0.0
    %515 = vmatpush1.msra.mxu0 0.0
    %516 = vmatprep.subr.mxu0 0.0
    %517 = vmatpush1.msra.mxu0 0.0
    %518 = vmatprep.subr.mxu0 0.0
    %519 = vmatpush1.msra.mxu0 0.0
    %520 = vmatprep.subr.mxu0 0.0
    %521 = vmatpush1.msra.mxu0 0.0
    %522 = vmatprep.subr.mxu0 0.0
    %523 = vmatpush1.msra.mxu0 0.0
    %524 = vmatprep.subr.mxu0 0.0
    %525 = vmatpush1.msra.mxu0 0.0
    %526 = vmatprep.subr.mxu0 0.0
    %527 = vmatpush1.msra.mxu0 0.0
    %528 = vmatprep.subr.mxu0 0.0
    %529 = vmatpush1.msra.mxu0 0.0
    %530 = vmatprep.subr.mxu0 0.0
    %531 = vmatpush1.msra.mxu0 0.0
    %532 = vmatprep.subr.mxu0 0.0
    %533 = vmatpush1.msra.mxu0 0.0
    %534 = vmatprep.subr.mxu0 0.0
    %535 = vmatpush1.msra.mxu0 0.0
    %536 = vmatprep.subr.mxu0 0.0
    %537 = vmatpush1.msra.mxu0 0.0
    %538 = vmatprep.subr.mxu0 0.0
    %539 = vmatpush1.msra.mxu0 0.0
    %540 = vmatprep.subr.mxu0 0.0
    %541 = vmatpush1.msra.mxu0 0.0
    %542 = vmatprep.subr.mxu0 0.0
    %543 = vmatpush1.msra.mxu0 0.0
    %544 = vmatprep.subr.mxu0 0.0
    %545 = vmatpush1.msra.mxu0 0.0
    %546 = vmatprep.subr.mxu0 0.0
    %547 = vmatpush1.msra.mxu0 0.0
    %548 = vmatprep.subr.mxu0 0.0
    %549 = vmatpush1.msra.mxu0 0.0
    %550 = vmatprep.subr.mxu0 0.0
    %551 = vmatpush1.msra.mxu0 0.0
    %552 = vmatprep.subr.mxu0 0.0
    %553 = vmatpush1.msra.mxu0 0.0
    %554 = vmatprep.subr.mxu0 0.0
    %555 = vmatpush1.msra.mxu0 0.0
    %556 = vmatprep.subr.mxu0 0.0
    %557 = vmatpush1.msra.mxu0 0.0
    %558 = vmatprep.subr.mxu0 0.0
    %559 = vmatpush1.msra.mxu0 0.0
    %560 = vmatprep.subr.mxu0 0.0
    %561 = vmatpush1.msra.mxu0 0.0
    %562 = vmatprep.subr.mxu0 0.0
    %563 = vmatpush1.msra.mxu0 0.0
    %564 = vmatprep.subr.mxu0 0.0
    %565 = vmatpush1.msra.mxu0 0.0
    %566 = vmatprep.subr.mxu0 0.0
    %567 = vmatpush1.msra.mxu0 0.0
    %568 = vmatprep.subr.mxu0 0.0
    %569 = vmatpush1.msra.mxu0 0.0
    %570 = vmatprep.mubr.f32.mxu0 0.0
    %v571 = vand.u32 %v47, 4294901760
    %572 = vmatmul.mubr.f32.gmra.mrb[0].mxu0 %v571
    %v573 = vpop.f32.mrb[0].mxu0
    %v574 = vadd.f32 %v490, %v573
    %v575 = vpop.f32.mrb[0].mxu0
    %576 = vmatprep.mubr.f32.mxu0 0.0
    %v577 = vand.u32 %v49, 4294901760
    %578 = vmatmul.mubr.f32.gmra.mrb[0].mxu0 %v577
    %v579 = vpop.f32.mrb[0].mxu0
    %v580 = vadd.f32 %v496, %v579
    %v581 = vpop.f32.mrb[0].mxu0
    %582 = vmatprep.mubr.f32.mxu0 0.0
    %v583 = vand.u32 %v51, 4294901760
    %584 = vmatmul.mubr.f32.gmra.mrb[0].mxu0 %v583
    %v585 = vpop.f32.mrb[0].mxu0
    %v586 = vadd.f32 %v502, %v585
    %v587 = vpop.f32.mrb[0].mxu0
    %588 = vdwg.mxu0
    %v589 = vmax.f32 %v574, 0.0
    %v590 = vmax.f32 %v580, 0.0
    %v591 = vmax.f32 %v586, 0.0
    %vm592 = vcmask 171008
    %v593 = vsel %vm592, %v27, 0
    %v595 = vsel %vm592, %v28, 0
    %v598 = vsel %vm592, %v29, 0
    %v601 = vsel %vm592, %v30, 0
    %v604 = vsel %vm592, %v31, 0
    %v607 = vsel %vm592, %v32, 0
    %vm609 = vcmask 1044480
    %v611 = vsel %vm609, %v591, 0
    %613 = vmatprep.subr.mxu0 0.0
    %v614 = vand.u32 %v589, 4294901760
    %615 = vmatpush1.msra.mxu0 %v614
    %616 = vmatprep.subr.mxu0 0.0
    %v617 = vand.u32 %v590, 4294901760
    %618 = vmatpush1.msra.mxu0 %v617
    %619 = vmatprep.subr.mxu0 0.0
    %v620 = vand.u32 %v611, 4294901760
    %621 = vmatpush1.msra.mxu0 %v620
    %622 = vmatprep.subr.mxu0 0.0
    %623 = vmatpush1.msra.mxu0 0.0
    %624 = vmatprep.subr.mxu0 0.0
    %625 = vmatpush1.msra.mxu0 0.0
    %626 = vmatprep.subr.mxu0 0.0
    %627 = vmatpush1.msra.mxu0 0.0
    %628 = vmatprep.subr.mxu0 0.0
    %629 = vmatpush1.msra.mxu0 0.0
    %630 = vmatprep.subr.mxu0 0.0
    %631 = vmatpush1.msra.mxu0 0.0
    %632 = vmatprep.subr.mxu0 0.0
    %633 = vmatpush1.msra.mxu0 0.0
    %634 = vmatprep.subr.mxu0 0.0
    %635 = vmatpush1.msra.mxu0 0.0
    %636 = vmatprep.subr.mxu0 0.0
    %637 = vmatpush1.msra.mxu0 0.0
    %638 = vmatprep.subr.mxu0 0.0
    %639 = vmatpush1.msra.mxu0 0.0
    %640 = vmatprep.subr.mxu0 0.0
    %641 = vmatpush1.msra.mxu0 0.0
    %642 = vmatprep.subr.mxu0 0.0
    %643 = vmatpush1.msra.mxu0 0.0
    %644 = vmatprep.subr.mxu0 0.0
    %645 = vmatpush1.msra.mxu0 0.0
    %646 = vmatprep.subr.mxu0 0.0
    %647 = vmatpush1.msra.mxu0 0.0
    %648 = vmatprep.subr.mxu0 0.0
    %649 = vmatpush1.msra.mxu0 0.0
    %650 = vmatprep.subr.mxu0 0.0
    %651 = vmatpush1.msra.mxu0 0.0
    %652 = vmatprep.subr.mxu0 0.0
    %653 = vmatpush1.msra.mxu0 0.0
    %654 = vmatprep.subr.mxu0 0.0
    %655 = vmatpush1.msra.mxu0 0.0
    %656 = vmatprep.subr.mxu0 0.0
    %657 = vmatpush1.msra.mxu0 0.0
    %658 = vmatprep.subr.mxu0 0.0
    %659 = vmatpush1.msra.mxu0 0.0
    %660 = vmatprep.subr.mxu0 0.0
    %661 = vmatpush1.msra.mxu0 0.0
    %662 = vmatprep.subr.mxu0 0.0
    %663 = vmatpush1.msra.mxu0 0.0
    %664 = vmatprep.subr.mxu0 0.0
    %665 = vmatpush1.msra.mxu0 0.0
    %666 = vmatprep.subr.mxu0 0.0
    %667 = vmatpush1.msra.mxu0 0.0
    %668 = vmatprep.subr.mxu0 0.0
    %669 = vmatpush1.msra.mxu0 0.0
    %670 = vmatprep.subr.mxu0 0.0
    %671 = vmatpush1.msra.mxu0 0.0
    %672 = vmatprep.subr.mxu0 0.0
    %673 = vmatpush1.msra.mxu0 0.0
    %674 = vmatprep.subr.mxu0 0.0
    %675 = vmatpush1.msra.mxu0 0.0
    %676 = vmatprep.subr.mxu0 0.0
    %677 = vmatpush1.msra.mxu0 0.0
    %678 = vmatprep.subr.mxu0 0.0
    %679 = vmatpush1.msra.mxu0 0.0
    %680 = vmatprep.mubr.f32.mxu0 0.0
    %v681 = vand.u32 %v593, 4294901760
    %v682 = vsub.f32 %v593, %v681
    %v683 = vand.u32 %v682, 4294901760
    %v684 = vsub.f32 %v682, %v683
    %v685 = vand.u32 %v684, 4294901760
    %686 = vmatmul.mubr.f32.gmra.mrb[0].mxu0 %v685
    %v687 = vpop.f32.mrb[0].mxu0
    %v688 = vadd.f32 0.0, %v687
    %v689 = vpop.f32.mrb[0].mxu0
    %690 = vmatprep.mubr.f32.mxu0 0.0
    %v691 = vand.u32 %v595, 4294901760
    %v692 = vsub.f32 %v595, %v691
    %v693 = vand.u32 %v692, 4294901760
    %v694 = vsub.f32 %v692, %v693
    %v695 = vand.u32 %v694, 4294901760
    %696 = vmatmul.mubr.f32.gmra.mrb[0].mxu0 %v695
    %v697 = vpop.f32.mrb[0].mxu0
    %v698 = vadd.f32 0.0, %v697
    %v699 = vpop.f32.mrb[0].mxu0
    %700 = vmatprep.mubr.f32.mxu0 0.0
    %v701 = vand.u32 %v598, 4294901760
    %v702 = vsub.f32 %v598, %v701
    %v703 = vand.u32 %v702, 4294901760
    %v704 = vsub.f32 %v702, %v703
    %v705 = vand.u32 %v704, 4294901760
    %706 = vmatmul.mubr.f32.gmra.mrb[0].mxu0 %v705
    %v707 = vpop.f32.mrb[0].mxu0
    %v708 = vadd.f32 0.0, %v707
    %v709 = vpop.f32.mrb[0].mxu0
    %710 = vmatprep.mubr.f32.mxu0 0.0
    %v711 = vand.u32 %v601, 4294901760
    %v712 = vsub.f32 %v601, %v711
    %v713 = vand.u32 %v712, 4294901760
    %v714 = vsub.f32 %v712, %v713
    %v715 = vand.u32 %v714, 4294901760
    %716 = vmatmul.mubr.f32.gmra.mrb[0].mxu0 %v715
    %v717 = vpop.f32.mrb[0].mxu0
    %v718 = vadd.f32 0.0, %v717
    %v719 = vpop.f32.mrb[0].mxu0
    %720 = vmatprep.mubr.f32.mxu0 0.0
    %v721 = vand.u32 %v604, 4294901760
    %v722 = vsub.f32 %v604, %v721
    %v723 = vand.u32 %v722, 4294901760
    %v724 = vsub.f32 %v722, %v723
    %v725 = vand.u32 %v724, 4294901760
    %726 = vmatmul.mubr.f32.gmra.mrb[0].mxu0 %v725
    %v727 = vpop.f32.mrb[0].mxu0
    %v728 = vadd.f32 0.0, %v727
    %v729 = vpop.f32.mrb[0].mxu0
    %730 = vmatprep.mubr.f32.mxu0 0.0
    %v731 = vand.u32 %v607, 4294901760
    %v732 = vsub.f32 %v607, %v731
    %v733 = vand.u32 %v732, 4294901760
    %v734 = vsub.f32 %v732, %v733
    %v735 = vand.u32 %v734, 4294901760
    %736 = vmatmul.mubr.f32.gmra.mrb[0].mxu0 %v735
    %v737 = vpop.f32.mrb[0].mxu0
    %v738 = vadd.f32 0.0, %v737
    %v739 = vpop.f32.mrb[0].mxu0
    %740 = vdwg.mxu0
    %741 = vmatprep.subr.mxu0 0.0
    %v742 = vand.u32 %v589, 4294901760
    %v743 = vsub.f32 %v589, %v742
    %v744 = vand.u32 %v743, 4294901760
    %v745 = vsub.f32 %v743, %v744
    %v746 = vand.u32 %v745, 4294901760
    %747 = vmatpush1.msra.mxu0 %v746
    %748 = vmatprep.subr.mxu0 0.0
    %v749 = vand.u32 %v590, 4294901760
    %v750 = vsub.f32 %v590, %v749
    %v751 = vand.u32 %v750, 4294901760
    %v752 = vsub.f32 %v750, %v751
    %v753 = vand.u32 %v752, 4294901760
    %754 = vmatpush1.msra.mxu0 %v753
    %755 = vmatprep.subr.mxu0 0.0
    %v756 = vand.u32 %v611, 4294901760
    %v757 = vsub.f32 %v611, %v756
    %v758 = vand.u32 %v757, 4294901760
    %v759 = vsub.f32 %v757, %v758
    %v760 = vand.u32 %v759, 4294901760
    %761 = vmatpush1.msra.mxu0 %v760
    %762 = vmatprep.subr.mxu0 0.0
    %763 = vmatpush1.msra.mxu0 0.0
    %764 = vmatprep.subr.mxu0 0.0
    %765 = vmatpush1.msra.mxu0 0.0
    %766 = vmatprep.subr.mxu0 0.0
    %767 = vmatpush1.msra.mxu0 0.0
    %768 = vmatprep.subr.mxu0 0.0
    %769 = vmatpush1.msra.mxu0 0.0
    %770 = vmatprep.subr.mxu0 0.0
    %771 = vmatpush1.msra.mxu0 0.0
    %772 = vmatprep.subr.mxu0 0.0
    %773 = vmatpush1.msra.mxu0 0.0
    %774 = vmatprep.subr.mxu0 0.0
    %775 = vmatpush1.msra.mxu0 0.0
    %776 = vmatprep.subr.mxu0 0.0
    %777 = vmatpush1.msra.mxu0 0.0
    %778 = vmatprep.subr.mxu0 0.0
    %779 = vmatpush1.msra.mxu0 0.0
    %780 = vmatprep.subr.mxu0 0.0
    %781 = vmatpush1.msra.mxu0 0.0
    %782 = vmatprep.subr.mxu0 0.0
    %783 = vmatpush1.msra.mxu0 0.0
    %784 = vmatprep.subr.mxu0 0.0
    %785 = vmatpush1.msra.mxu0 0.0
    %786 = vmatprep.subr.mxu0 0.0
    %787 = vmatpush1.msra.mxu0 0.0
    %788 = vmatprep.subr.mxu0 0.0
    %789 = vmatpush1.msra.mxu0 0.0
    %790 = vmatprep.subr.mxu0 0.0
    %791 = vmatpush1.msra.mxu0 0.0
    %792 = vmatprep.subr.mxu0 0.0
    %793 = vmatpush1.msra.mxu0 0.0
    %794 = vmatprep.subr.mxu0 0.0
    %795 = vmatpush1.msra.mxu0 0.0
    %796 = vmatprep.subr.mxu0 0.0
    %797 = vmatpush1.msra.mxu0 0.0
    %798 = vmatprep.subr.mxu0 0.0
    %799 = vmatpush1.msra.mxu0 0.0
    %800 = vmatprep.subr.mxu0 0.0
    %801 = vmatpush1.msra.mxu0 0.0
    %802 = vmatprep.subr.mxu0 0.0
    %803 = vmatpush1.msra.mxu0 0.0
    %804 = vmatprep.subr.mxu0 0.0
    %805 = vmatpush1.msra.mxu0 0.0
    %806 = vmatprep.subr.mxu0 0.0
    %807 = vmatpush1.msra.mxu0 0.0
    %808 = vmatprep.subr.mxu0 0.0
    %809 = vmatpush1.msra.mxu0 0.0
    %810 = vmatprep.subr.mxu0 0.0
    %811 = vmatpush1.msra.mxu0 0.0
    %812 = vmatprep.subr.mxu0 0.0
    %813 = vmatpush1.msra.mxu0 0.0
    %814 = vmatprep.subr.mxu0 0.0
    %815 = vmatpush1.msra.mxu0 0.0
    %816 = vmatprep.subr.mxu0 0.0
    %817 = vmatpush1.msra.mxu0 0.0
    %818 = vmatprep.subr.mxu0 0.0
    %819 = vmatpush1.msra.mxu0 0.0
    %820 = vmatprep.mubr.f32.mxu0 0.0
    %v821 = vand.u32 %v593, 4294901760
    %822 = vmatmul.mubr.f32.gmra.mrb[0].mxu0 %v821
    %v823 = vpop.f32.mrb[0].mxu0
    %v824 = vadd.f32 %v688, %v823
    %v825 = vpop.f32.mrb[0].mxu0
    %826 = vmatprep.mubr.f32.mxu0 0.0
    %v827 = vand.u32 %v595, 4294901760
    %828 = vmatmul.mubr.f32.gmra.mrb[0].mxu0 %v827
    %v829 = vpop.f32.mrb[0].mxu0
    %v830 = vadd.f32 %v698, %v829
    %v831 = vpop.f32.mrb[0].mxu0
    %832 = vmatprep.mubr.f32.mxu0 0.0
    %v833 = vand.u32 %v598, 4294901760
    %834 = vmatmul.mubr.f32.gmra.mrb[0].mxu0 %v833
    %v835 = vpop.f32.mrb[0].mxu0
    %v836 = vadd.f32 %v708, %v835
    %v837 = vpop.f32.mrb[0].mxu0
    %838 = vmatprep.mubr.f32.mxu0 0.0
    %v839 = vand.u32 %v601, 4294901760
    %840 = vmatmul.mubr.f32.gmra.mrb[0].mxu0 %v839
    %v841 = vpop.f32.mrb[0].mxu0
    %v842 = vadd.f32 %v718, %v841
    %v843 = vpop.f32.mrb[0].mxu0
    %844 = vmatprep.mubr.f32.mxu0 0.0
    %v845 = vand.u32 %v604, 4294901760
    %846 = vmatmul.mubr.f32.gmra.mrb[0].mxu0 %v845
    %v847 = vpop.f32.mrb[0].mxu0
    %v848 = vadd.f32 %v728, %v847
    %v849 = vpop.f32.mrb[0].mxu0
    %850 = vmatprep.mubr.f32.mxu0 0.0
    %v851 = vand.u32 %v607, 4294901760
    %852 = vmatmul.mubr.f32.gmra.mrb[0].mxu0 %v851
    %v853 = vpop.f32.mrb[0].mxu0
    %v854 = vadd.f32 %v738, %v853
    %v855 = vpop.f32.mrb[0].mxu0
    %856 = vdwg.mxu0
    %857 = vmatprep.subr.mxu0 0.0
    %v858 = vand.u32 %v589, 4294901760
    %v859 = vsub.f32 %v589, %v858
    %860 = vmatpush1.msra.mxu0 %v859
    %861 = vmatprep.subr.mxu0 0.0
    %v862 = vand.u32 %v590, 4294901760
    %v863 = vsub.f32 %v590, %v862
    %864 = vmatpush1.msra.mxu0 %v863
    %865 = vmatprep.subr.mxu0 0.0
    %v866 = vand.u32 %v611, 4294901760
    %v867 = vsub.f32 %v611, %v866
    %868 = vmatpush1.msra.mxu0 %v867
    %869 = vmatprep.subr.mxu0 0.0
    %870 = vmatpush1.msra.mxu0 0.0
    %871 = vmatprep.subr.mxu0 0.0
    %872 = vmatpush1.msra.mxu0 0.0
    %873 = vmatprep.subr.mxu0 0.0
    %874 = vmatpush1.msra.mxu0 0.0
    %875 = vmatprep.subr.mxu0 0.0
    %876 = vmatpush1.msra.mxu0 0.0
    %877 = vmatprep.subr.mxu0 0.0
    %878 = vmatpush1.msra.mxu0 0.0
    %879 = vmatprep.subr.mxu0 0.0
    %880 = vmatpush1.msra.mxu0 0.0
    %881 = vmatprep.subr.mxu0 0.0
    %882 = vmatpush1.msra.mxu0 0.0
    %883 = vmatprep.subr.mxu0 0.0
    %884 = vmatpush1.msra.mxu0 0.0
    %885 = vmatprep.subr.mxu0 0.0
    %886 = vmatpush1.msra.mxu0 0.0
    %887 = vmatprep.subr.mxu0 0.0
    %888 = vmatpush1.msra.mxu0 0.0
    %889 = vmatprep.subr.mxu0 0.0
    %890 = vmatpush1.msra.mxu0 0.0
    %891 = vmatprep.subr.mxu0 0.0
    %892 = vmatpush1.msra.mxu0 0.0
    %893 = vmatprep.subr.mxu0 0.0
    %894 = vmatpush1.msra.mxu0 0.0
    %895 = vmatprep.subr.mxu0 0.0
    %896 = vmatpush1.msra.mxu0 0.0
    %897 = vmatprep.subr.mxu0 0.0
    %898 = vmatpush1.msra.mxu0 0.0
    %899 = vmatprep.subr.mxu0 0.0
    %900 = vmatpush1.msra.mxu0 0.0
    %901 = vmatprep.subr.mxu0 0.0
    %902 = vmatpush1.msra.mxu0 0.0
    %903 = vmatprep.subr.mxu0 0.0
    %904 = vmatpush1.msra.mxu0 0.0
    %905 = vmatprep.subr.mxu0 0.0
    %906 = vmatpush1.msra.mxu0 0.0
    %907 = vmatprep.subr.mxu0 0.0
    %908 = vmatpush1.msra.mxu0 0.0
    %909 = vmatprep.subr.mxu0 0.0
    %910 = vmatpush1.msra.mxu0 0.0
    %911 = vmatprep.subr.mxu0 0.0
    %912 = vmatpush1.msra.mxu0 0.0
    %913 = vmatprep.subr.mxu0 0.0
    %914 = vmatpush1.msra.mxu0 0.0
    %915 = vmatprep.subr.mxu0 0.0
    %916 = vmatpush1.msra.mxu0 0.0
    %917 = vmatprep.subr.mxu0 0.0
    %918 = vmatpush1.msra.mxu0 0.0
    %919 = vmatprep.subr.mxu0 0.0
    %920 = vmatpush1.msra.mxu0 0.0
    %921 = vmatprep.subr.mxu0 0.0
    %922 = vmatpush1.msra.mxu0 0.0
    %923 = vmatprep.subr.mxu0 0.0
    %924 = vmatpush1.msra.mxu0 0.0
    %925 = vmatprep.subr.mxu0 0.0
    %926 = vmatpush1.msra.mxu0 0.0
    %927 = vmatprep.mubr.f32.mxu0 0.0
    %v928 = vand.u32 %v593, 4294901760
    %v929 = vsub.f32 %v593, %v928
    %930 = vmatmul.mubr.f32.gmra.mrb[0].mxu0 %v929
    %v931 = vpop.f32.mrb[0].mxu0
    %v932 = vadd.f32 %v824, %v931
    %v933 = vpop.f32.mrb[0].mxu0
    %934 = vmatprep.mubr.f32.mxu0 0.0
    %v935 = vand.u32 %v595, 4294901760
    %v936 = vsub.f32 %v595, %v935
    %937 = vmatmul.mubr.f32.gmra.mrb[0].mxu0 %v936
    %v938 = vpop.f32.mrb[0].mxu0
    %v939 = vadd.f32 %v830, %v938
    %v940 = vpop.f32.mrb[0].mxu0
    %941 = vmatprep.mubr.f32.mxu0 0.0
    %v942 = vand.u32 %v598, 4294901760
    %v943 = vsub.f32 %v598, %v942
    %944 = vmatmul.mubr.f32.gmra.mrb[0].mxu0 %v943
    %v945 = vpop.f32.mrb[0].mxu0
    %v946 = vadd.f32 %v836, %v945
    %v947 = vpop.f32.mrb[0].mxu0
    %948 = vmatprep.mubr.f32.mxu0 0.0
    %v949 = vand.u32 %v601, 4294901760
    %v950 = vsub.f32 %v601, %v949
    %951 = vmatmul.mubr.f32.gmra.mrb[0].mxu0 %v950
    %v952 = vpop.f32.mrb[0].mxu0
    %v953 = vadd.f32 %v842, %v952
    %v954 = vpop.f32.mrb[0].mxu0
    %955 = vmatprep.mubr.f32.mxu0 0.0
    %v956 = vand.u32 %v604, 4294901760
    %v957 = vsub.f32 %v604, %v956
    %958 = vmatmul.mubr.f32.gmra.mrb[0].mxu0 %v957
    %v959 = vpop.f32.mrb[0].mxu0
    %v960 = vadd.f32 %v848, %v959
    %v961 = vpop.f32.mrb[0].mxu0
    %962 = vmatprep.mubr.f32.mxu0 0.0
    %v963 = vand.u32 %v607, 4294901760
    %v964 = vsub.f32 %v607, %v963
    %965 = vmatmul.mubr.f32.gmra.mrb[0].mxu0 %v964
    %v966 = vpop.f32.mrb[0].mxu0
    %v967 = vadd.f32 %v854, %v966
    %v968 = vpop.f32.mrb[0].mxu0
    %969 = vdwg.mxu0
    %970 = vmatprep.subr.mxu0 0.0
    %v971 = vand.u32 %v589, 4294901760
    %972 = vmatpush1.msra.mxu0 %v971
    %973 = vmatprep.subr.mxu0 0.0
    %v974 = vand.u32 %v590, 4294901760
    %975 = vmatpush1.msra.mxu0 %v974
    %976 = vmatprep.subr.mxu0 0.0
    %v977 = vand.u32 %v611, 4294901760
    %978 = vmatpush1.msra.mxu0 %v977
    %979 = vmatprep.subr.mxu0 0.0
    %980 = vmatpush1.msra.mxu0 0.0
    %981 = vmatprep.subr.mxu0 0.0
    %982 = vmatpush1.msra.mxu0 0.0
    %983 = vmatprep.subr.mxu0 0.0
    %984 = vmatpush1.msra.mxu0 0.0
    %985 = vmatprep.subr.mxu0 0.0
    %986 = vmatpush1.msra.mxu0 0.0
    %987 = vmatprep.subr.mxu0 0.0
    %988 = vmatpush1.msra.mxu0 0.0
    %989 = vmatprep.subr.mxu0 0.0
    %990 = vmatpush1.msra.mxu0 0.0
    %991 = vmatprep.subr.mxu0 0.0
    %992 = vmatpush1.msra.mxu0 0.0
    %993 = vmatprep.subr.mxu0 0.0
    %994 = vmatpush1.msra.mxu0 0.0
    %995 = vmatprep.subr.mxu0 0.0
    %996 = vmatpush1.msra.mxu0 0.0
    %997 = vmatprep.subr.mxu0 0.0
    %998 = vmatpush1.msra.mxu0 0.0
    %999 = vmatprep.subr.mxu0 0.0
    %1000 = vmatpush1.msra.mxu0 0.0
    %1001 = vmatprep.subr.mxu0 0.0
    %1002 = vmatpush1.msra.mxu0 0.0
    %1003 = vmatprep.subr.mxu0 0.0
    %1004 = vmatpush1.msra.mxu0 0.0
    %1005 = vmatprep.subr.mxu0 0.0
    %1006 = vmatpush1.msra.mxu0 0.0
    %1007 = vmatprep.subr.mxu0 0.0
    %1008 = vmatpush1.msra.mxu0 0.0
    %1009 = vmatprep.subr.mxu0 0.0
    %1010 = vmatpush1.msra.mxu0 0.0
    %1011 = vmatprep.subr.mxu0 0.0
    %1012 = vmatpush1.msra.mxu0 0.0
    %1013 = vmatprep.subr.mxu0 0.0
    %1014 = vmatpush1.msra.mxu0 0.0
    %1015 = vmatprep.subr.mxu0 0.0
    %1016 = vmatpush1.msra.mxu0 0.0
    %1017 = vmatprep.subr.mxu0 0.0
    %1018 = vmatpush1.msra.mxu0 0.0
    %1019 = vmatprep.subr.mxu0 0.0
    %1020 = vmatpush1.msra.mxu0 0.0
    %1021 = vmatprep.subr.mxu0 0.0
    %1022 = vmatpush1.msra.mxu0 0.0
    %1023 = vmatprep.subr.mxu0 0.0
    %1024 = vmatpush1.msra.mxu0 0.0
    %1025 = vmatprep.subr.mxu0 0.0
    %1026 = vmatpush1.msra.mxu0 0.0
    %1027 = vmatprep.subr.mxu0 0.0
    %1028 = vmatpush1.msra.mxu0 0.0
    %1029 = vmatprep.subr.mxu0 0.0
    %1030 = vmatpush1.msra.mxu0 0.0
    %1031 = vmatprep.subr.mxu0 0.0
    %1032 = vmatpush1.msra.mxu0 0.0
    %1033 = vmatprep.subr.mxu0 0.0
    %1034 = vmatpush1.msra.mxu0 0.0
    %1035 = vmatprep.subr.mxu0 0.0
    %1036 = vmatpush1.msra.mxu0 0.0
    %1037 = vmatprep.mubr.f32.mxu0 0.0
    %v1038 = vand.u32 %v593, 4294901760
    %v1039 = vsub.f32 %v593, %v1038
    %v1040 = vand.u32 %v1039, 4294901760
    %1041 = vmatmul.mubr.f32.gmra.mrb[0].mxu0 %v1040
    %v1042 = vpop.f32.mrb[0].mxu0
    %v1043 = vadd.f32 %v932, %v1042
    %v1044 = vpop.f32.mrb[0].mxu0
    %1045 = vmatprep.mubr.f32.mxu0 0.0
    %v1046 = vand.u32 %v595, 4294901760
    %v1047 = vsub.f32 %v595, %v1046
    %v1048 = vand.u32 %v1047, 4294901760
    %1049 = vmatmul.mubr.f32.gmra.mrb[0].mxu0 %v1048
    %v1050 = vpop.f32.mrb[0].mxu0
    %v1051 = vadd.f32 %v939, %v1050
    %v1052 = vpop.f32.mrb[0].mxu0
    %1053 = vmatprep.mubr.f32.mxu0 0.0
    %v1054 = vand.u32 %v598, 4294901760
    %v1055 = vsub.f32 %v598, %v1054
    %v1056 = vand.u32 %v1055, 4294901760
    %1057 = vmatmul.mubr.f32.gmra.mrb[0].mxu0 %v1056
    %v1058 = vpop.f32.mrb[0].mxu0
    %v1059 = vadd.f32 %v946, %v1058
    %v1060 = vpop.f32.mrb[0].mxu0
    %1061 = vmatprep.mubr.f32.mxu0 0.0
    %v1062 = vand.u32 %v601, 4294901760
    %v1063 = vsub.f32 %v601, %v1062
    %v1064 = vand.u32 %v1063, 4294901760
    %1065 = vmatmul.mubr.f32.gmra.mrb[0].mxu0 %v1064
    %v1066 = vpop.f32.mrb[0].mxu0
    %v1067 = vadd.f32 %v953, %v1066
    %v1068 = vpop.f32.mrb[0].mxu0
    %1069 = vmatprep.mubr.f32.mxu0 0.0
    %v1070 = vand.u32 %v604, 4294901760
    %v1071 = vsub.f32 %v604, %v1070
    %v1072 = vand.u32 %v1071, 4294901760
    %1073 = vmatmul.mubr.f32.gmra.mrb[0].mxu0 %v1072
    %v1074 = vpop.f32.mrb[0].mxu0
    %v1075 = vadd.f32 %v960, %v1074
    %v1076 = vpop.f32.mrb[0].mxu0
    %1077 = vmatprep.mubr.f32.mxu0 0.0
    %v1078 = vand.u32 %v607, 4294901760
    %v1079 = vsub.f32 %v607, %v1078
    %v1080 = vand.u32 %v1079, 4294901760
    %1081 = vmatmul.mubr.f32.gmra.mrb[0].mxu0 %v1080
    %v1082 = vpop.f32.mrb[0].mxu0
    %v1083 = vadd.f32 %v967, %v1082
    %v1084 = vpop.f32.mrb[0].mxu0
    %1085 = vdwg.mxu0
    %1086 = vmatprep.subr.mxu0 0.0
    %v1087 = vand.u32 %v589, 4294901760
    %v1088 = vsub.f32 %v589, %v1087
    %v1089 = vand.u32 %v1088, 4294901760
    %1090 = vmatpush1.msra.mxu0 %v1089
    %1091 = vmatprep.subr.mxu0 0.0
    %v1092 = vand.u32 %v590, 4294901760
    %v1093 = vsub.f32 %v590, %v1092
    %v1094 = vand.u32 %v1093, 4294901760
    %1095 = vmatpush1.msra.mxu0 %v1094
    %1096 = vmatprep.subr.mxu0 0.0
    %v1097 = vand.u32 %v611, 4294901760
    %v1098 = vsub.f32 %v611, %v1097
    %v1099 = vand.u32 %v1098, 4294901760
    %1100 = vmatpush1.msra.mxu0 %v1099
    %1101 = vmatprep.subr.mxu0 0.0
    %1102 = vmatpush1.msra.mxu0 0.0
    %1103 = vmatprep.subr.mxu0 0.0
    %1104 = vmatpush1.msra.mxu0 0.0
    %1105 = vmatprep.subr.mxu0 0.0
    %1106 = vmatpush1.msra.mxu0 0.0
    %1107 = vmatprep.subr.mxu0 0.0
    %1108 = vmatpush1.msra.mxu0 0.0
    %1109 = vmatprep.subr.mxu0 0.0
    %1110 = vmatpush1.msra.mxu0 0.0
    %1111 = vmatprep.subr.mxu0 0.0
    %1112 = vmatpush1.msra.mxu0 0.0
    %1113 = vmatprep.subr.mxu0 0.0
    %1114 = vmatpush1.msra.mxu0 0.0
    %1115 = vmatprep.subr.mxu0 0.0
    %1116 = vmatpush1.msra.mxu0 0.0
    %1117 = vmatprep.subr.mxu0 0.0
    %1118 = vmatpush1.msra.mxu0 0.0
    %1119 = vmatprep.subr.mxu0 0.0
    %1120 = vmatpush1.msra.mxu0 0.0
    %1121 = vmatprep.subr.mxu0 0.0
    %1122 = vmatpush1.msra.mxu0 0.0
    %1123 = vmatprep.subr.mxu0 0.0
    %1124 = vmatpush1.msra.mxu0 0.0
    %1125 = vmatprep.subr.mxu0 0.0
    %1126 = vmatpush1.msra.mxu0 0.0
    %1127 = vmatprep.subr.mxu0 0.0
    %1128 = vmatpush1.msra.mxu0 0.0
    %1129 = vmatprep.subr.mxu0 0.0
    %1130 = vmatpush1.msra.mxu0 0.0
    %1131 = vmatprep.subr.mxu0 0.0
    %1132 = vmatpush1.msra.mxu0 0.0
    %1133 = vmatprep.subr.mxu0 0.0
    %1134 = vmatpush1.msra.mxu0 0.0
    %1135 = vmatprep.subr.mxu0 0.0
    %1136 = vmatpush1.msra.mxu0 0.0
    %1137 = vmatprep.subr.mxu0 0.0
    %1138 = vmatpush1.msra.mxu0 0.0
    %1139 = vmatprep.subr.mxu0 0.0
    %1140 = vmatpush1.msra.mxu0 0.0
    %1141 = vmatprep.subr.mxu0 0.0
    %1142 = vmatpush1.msra.mxu0 0.0
    %1143 = vmatprep.subr.mxu0 0.0
    %1144 = vmatpush1.msra.mxu0 0.0
    %1145 = vmatprep.subr.mxu0 0.0
    %1146 = vmatpush1.msra.mxu0 0.0
    %1147 = vmatprep.subr.mxu0 0.0
    %1148 = vmatpush1.msra.mxu0 0.0
    %1149 = vmatprep.subr.mxu0 0.0
    %1150 = vmatpush1.msra.mxu0 0.0
    %1151 = vmatprep.subr.mxu0 0.0
    %1152 = vmatpush1.msra.mxu0 0.0
    %1153 = vmatprep.subr.mxu0 0.0
    %1154 = vmatpush1.msra.mxu0 0.0
    %1155 = vmatprep.subr.mxu0 0.0
    %1156 = vmatpush1.msra.mxu0 0.0
    %1157 = vmatprep.subr.mxu0 0.0
    %1158 = vmatpush1.msra.mxu0 0.0
    %1159 = vmatprep.mubr.f32.mxu0 0.0
    %v1160 = vand.u32 %v593, 4294901760
    %1161 = vmatmul.mubr.f32.gmra.mrb[0].mxu0 %v1160
    %v1162 = vpop.f32.mrb[0].mxu0
    %v1163 = vadd.f32 %v1043, %v1162
    %v1164 = vpop.f32.mrb[0].mxu0
    %1165 = vmatprep.mubr.f32.mxu0 0.0
    %v1166 = vand.u32 %v595, 4294901760
    %1167 = vmatmul.mubr.f32.gmra.mrb[0].mxu0 %v1166
    %v1168 = vpop.f32.mrb[0].mxu0
    %v1169 = vadd.f32 %v1051, %v1168
    %v1170 = vpop.f32.mrb[0].mxu0
    %1171 = vmatprep.mubr.f32.mxu0 0.0
    %v1172 = vand.u32 %v598, 4294901760
    %1173 = vmatmul.mubr.f32.gmra.mrb[0].mxu0 %v1172
    %v1174 = vpop.f32.mrb[0].mxu0
    %v1175 = vadd.f32 %v1059, %v1174
    %v1176 = vpop.f32.mrb[0].mxu0
    %1177 = vmatprep.mubr.f32.mxu0 0.0
    %v1178 = vand.u32 %v601, 4294901760
    %1179 = vmatmul.mubr.f32.gmra.mrb[0].mxu0 %v1178
    %v1180 = vpop.f32.mrb[0].mxu0
    %v1181 = vadd.f32 %v1067, %v1180
    %v1182 = vpop.f32.mrb[0].mxu0
    %1183 = vmatprep.mubr.f32.mxu0 0.0
    %v1184 = vand.u32 %v604, 4294901760
    %1185 = vmatmul.mubr.f32.gmra.mrb[0].mxu0 %v1184
    %v1186 = vpop.f32.mrb[0].mxu0
    %v1187 = vadd.f32 %v1075, %v1186
    %v1188 = vpop.f32.mrb[0].mxu0
    %1189 = vmatprep.mubr.f32.mxu0 0.0
    %v1190 = vand.u32 %v607, 4294901760
    %1191 = vmatmul.mubr.f32.gmra.mrb[0].mxu0 %v1190
    %v1192 = vpop.f32.mrb[0].mxu0
    %v1193 = vadd.f32 %v1083, %v1192
    %v1194 = vpop.f32.mrb[0].mxu0
    %1195 = vdwg.mxu0
    %1196 = vmatprep.subr.mxu0 0.0
    %v1197 = vand.u32 %v589, 4294901760
    %1198 = vmatpush1.msra.mxu0 %v1197
    %1199 = vmatprep.subr.mxu0 0.0
    %v1200 = vand.u32 %v590, 4294901760
    %1201 = vmatpush1.msra.mxu0 %v1200
    %1202 = vmatprep.subr.mxu0 0.0
    %v1203 = vand.u32 %v611, 4294901760
    %1204 = vmatpush1.msra.mxu0 %v1203
    %1205 = vmatprep.subr.mxu0 0.0
    %1206 = vmatpush1.msra.mxu0 0.0
    %1207 = vmatprep.subr.mxu0 0.0
    %1208 = vmatpush1.msra.mxu0 0.0
    %1209 = vmatprep.subr.mxu0 0.0
    %1210 = vmatpush1.msra.mxu0 0.0
    %1211 = vmatprep.subr.mxu0 0.0
    %1212 = vmatpush1.msra.mxu0 0.0
    %1213 = vmatprep.subr.mxu0 0.0
    %1214 = vmatpush1.msra.mxu0 0.0
    %1215 = vmatprep.subr.mxu0 0.0
    %1216 = vmatpush1.msra.mxu0 0.0
    %1217 = vmatprep.subr.mxu0 0.0
    %1218 = vmatpush1.msra.mxu0 0.0
    %1219 = vmatprep.subr.mxu0 0.0
    %1220 = vmatpush1.msra.mxu0 0.0
    %1221 = vmatprep.subr.mxu0 0.0
    %1222 = vmatpush1.msra.mxu0 0.0
    %1223 = vmatprep.subr.mxu0 0.0
    %1224 = vmatpush1.msra.mxu0 0.0
    %1225 = vmatprep.subr.mxu0 0.0
    %1226 = vmatpush1.msra.mxu0 0.0
    %1227 = vmatprep.subr.mxu0 0.0
    %1228 = vmatpush1.msra.mxu0 0.0
    %1229 = vmatprep.subr.mxu0 0.0
    %1230 = vmatpush1.msra.mxu0 0.0
    %1231 = vmatprep.subr.mxu0 0.0
    %1232 = vmatpush1.msra.mxu0 0.0
    %1233 = vmatprep.subr.mxu0 0.0
    %1234 = vmatpush1.msra.mxu0 0.0
    %1235 = vmatprep.subr.mxu0 0.0
    %1236 = vmatpush1.msra.mxu0 0.0
    %1237 = vmatprep.subr.mxu0 0.0
    %1238 = vmatpush1.msra.mxu0 0.0
    %1239 = vmatprep.subr.mxu0 0.0
    %1240 = vmatpush1.msra.mxu0 0.0
    %1241 = vmatprep.subr.mxu0 0.0
    %1242 = vmatpush1.msra.mxu0 0.0
    %1243 = vmatprep.subr.mxu0 0.0
    %1244 = vmatpush1.msra.mxu0 0.0
    %1245 = vmatprep.subr.mxu0 0.0
    %1246 = vmatpush1.msra.mxu0 0.0
    %1247 = vmatprep.subr.mxu0 0.0
    %1248 = vmatpush1.msra.mxu0 0.0
    %1249 = vmatprep.subr.mxu0 0.0
    %1250 = vmatpush1.msra.mxu0 0.0
    %1251 = vmatprep.subr.mxu0 0.0
    %1252 = vmatpush1.msra.mxu0 0.0
    %1253 = vmatprep.subr.mxu0 0.0
    %1254 = vmatpush1.msra.mxu0 0.0
    %1255 = vmatprep.subr.mxu0 0.0
    %1256 = vmatpush1.msra.mxu0 0.0
    %1257 = vmatprep.subr.mxu0 0.0
    %1258 = vmatpush1.msra.mxu0 0.0
    %1259 = vmatprep.subr.mxu0 0.0
    %1260 = vmatpush1.msra.mxu0 0.0
    %1261 = vmatprep.subr.mxu0 0.0
    %1262 = vmatpush1.msra.mxu0 0.0
    %1263 = vmatprep.mubr.f32.mxu0 0.0
    %v1264 = vand.u32 %v593, 4294901760
    %1265 = vmatmul.mubr.f32.gmra.mrb[0].mxu0 %v1264
    %v1266 = vpop.f32.mrb[0].mxu0
    %v1267 = vadd.f32 %v1163, %v1266
    %v1268 = vpop.f32.mrb[0].mxu0
    %1269 = vmatprep.mubr.f32.mxu0 0.0
    %v1270 = vand.u32 %v595, 4294901760
    %1271 = vmatmul.mubr.f32.gmra.mrb[0].mxu0 %v1270
    %v1272 = vpop.f32.mrb[0].mxu0
    %v1273 = vadd.f32 %v1169, %v1272
    %v1274 = vpop.f32.mrb[0].mxu0
    %1275 = vmatprep.mubr.f32.mxu0 0.0
    %v1276 = vand.u32 %v598, 4294901760
    %1277 = vmatmul.mubr.f32.gmra.mrb[0].mxu0 %v1276
    %v1278 = vpop.f32.mrb[0].mxu0
    %v1279 = vadd.f32 %v1175, %v1278
    %v1280 = vpop.f32.mrb[0].mxu0
    %1281 = vmatprep.mubr.f32.mxu0 0.0
    %v1282 = vand.u32 %v601, 4294901760
    %1283 = vmatmul.mubr.f32.gmra.mrb[0].mxu0 %v1282
    %v1284 = vpop.f32.mrb[0].mxu0
    %v1285 = vadd.f32 %v1181, %v1284
    %v1286 = vpop.f32.mrb[0].mxu0
    %1287 = vmatprep.mubr.f32.mxu0 0.0
    %v1288 = vand.u32 %v604, 4294901760
    %1289 = vmatmul.mubr.f32.gmra.mrb[0].mxu0 %v1288
    %v1290 = vpop.f32.mrb[0].mxu0
    %v1291 = vadd.f32 %v1187, %v1290
    %v1292 = vpop.f32.mrb[0].mxu0
    %1293 = vmatprep.mubr.f32.mxu0 0.0
    %v1294 = vand.u32 %v607, 4294901760
    %1295 = vmatmul.mubr.f32.gmra.mrb[0].mxu0 %v1294
    %v1296 = vpop.f32.mrb[0].mxu0
    %v1297 = vadd.f32 %v1193, %v1296
    %v1298 = vpop.f32.mrb[0].mxu0
    %1299 = vdwg.mxu0
    %v1300 = vmax.f32 %v1267, 0.0
    %v1301 = vmax.f32 %v1273, 0.0
    %v1302 = vmax.f32 %v1279, 0.0
    %v1303 = vmax.f32 %v1285, 0.0
    %v1304 = vmax.f32 %v1291, 0.0
    %v1305 = vmax.f32 %v1297, 0.0
    %1307 = vrot.lane.b32.xlu0 %v34, 105
    %v1308 = vpop.permute.xlu0 %1307
    %vm1309 = vcmask 334848
    %v1310 = vsel %vm1309, %v1308, 0
    %v1313 = vsel %vm35, %v1305, 0
    %1315 = vmatprep.subr.mxu0 0.0
    %v1316 = vand.u32 %v1300, 4294901760
    %1317 = vmatpush1.msra.mxu0 %v1316
    %1318 = vmatprep.subr.mxu0 0.0
    %v1319 = vand.u32 %v1301, 4294901760
    %1320 = vmatpush1.msra.mxu0 %v1319
    %1321 = vmatprep.subr.mxu0 0.0
    %v1322 = vand.u32 %v1302, 4294901760
    %1323 = vmatpush1.msra.mxu0 %v1322
    %1324 = vmatprep.subr.mxu0 0.0
    %v1325 = vand.u32 %v1303, 4294901760
    %1326 = vmatpush1.msra.mxu0 %v1325
    %1327 = vmatprep.subr.mxu0 0.0
    %v1328 = vand.u32 %v1304, 4294901760
    %1329 = vmatpush1.msra.mxu0 %v1328
    %1330 = vmatprep.subr.mxu0 0.0
    %v1331 = vand.u32 %v1313, 4294901760
    %1332 = vmatpush1.msra.mxu0 %v1331
    %1333 = vmatprep.subr.mxu0 0.0
    %1334 = vmatpush1.msra.mxu0 0.0
    %1335 = vmatprep.subr.mxu0 0.0
    %1336 = vmatpush1.msra.mxu0 0.0
    %1337 = vmatprep.subr.mxu0 0.0
    %1338 = vmatpush1.msra.mxu0 0.0
    %1339 = vmatprep.subr.mxu0 0.0
    %1340 = vmatpush1.msra.mxu0 0.0
    %1341 = vmatprep.subr.mxu0 0.0
    %1342 = vmatpush1.msra.mxu0 0.0
    %1343 = vmatprep.subr.mxu0 0.0
    %1344 = vmatpush1.msra.mxu0 0.0
    %1345 = vmatprep.subr.mxu0 0.0
    %1346 = vmatpush1.msra.mxu0 0.0
    %1347 = vmatprep.subr.mxu0 0.0
    %1348 = vmatpush1.msra.mxu0 0.0
    %1349 = vmatprep.subr.mxu0 0.0
    %1350 = vmatpush1.msra.mxu0 0.0
    %1351 = vmatprep.subr.mxu0 0.0
    %1352 = vmatpush1.msra.mxu0 0.0
    %1353 = vmatprep.subr.mxu0 0.0
    %1354 = vmatpush1.msra.mxu0 0.0
    %1355 = vmatprep.subr.mxu0 0.0
    %1356 = vmatpush1.msra.mxu0 0.0
    %1357 = vmatprep.subr.mxu0 0.0
    %1358 = vmatpush1.msra.mxu0 0.0
    %1359 = vmatprep.subr.mxu0 0.0
    %1360 = vmatpush1.msra.mxu0 0.0
    %1361 = vmatprep.subr.mxu0 0.0
    %1362 = vmatpush1.msra.mxu0 0.0
    %1363 = vmatprep.subr.mxu0 0.0
    %1364 = vmatpush1.msra.mxu0 0.0
    %1365 = vmatprep.subr.mxu0 0.0
    %1366 = vmatpush1.msra.mxu0 0.0
    %1367 = vmatprep.subr.mxu0 0.0
    %1368 = vmatpush1.msra.mxu0 0.0
    %1369 = vmatprep.subr.mxu0 0.0
    %1370 = vmatpush1.msra.mxu0 0.0
    %1371 = vmatprep.subr.mxu0 0.0
    %1372 = vmatpush1.msra.mxu0 0.0
    %1373 = vmatprep.subr.mxu0 0.0
    %1374 = vmatpush1.msra.mxu0 0.0
    %1375 = vmatprep.subr.mxu0 0.0
    %1376 = vmatpush1.msra.mxu0 0.0
    %1377 = vmatprep.subr.mxu0 0.0
    %1378 = vmatpush1.msra.mxu0 0.0
    %1379 = vmatprep.subr.mxu0 0.0
    %1380 = vmatpush1.msra.mxu0 0.0
    %1381 = vmatprep.subr.mxu0 0.0
    %1382 = vmatpush1.msra.mxu0 0.0
    %1383 = vmatprep.subr.mxu0 0.0
    %1384 = vmatpush1.msra.mxu0 0.0
    %1385 = vmatprep.mubr.f32.mxu0 0.0
    %v1386 = vand.u32 %v1310, 4294901760
    %v1387 = vsub.f32 %v1310, %v1386
    %v1388 = vand.u32 %v1387, 4294901760
    %v1389 = vsub.f32 %v1387, %v1388
    %v1390 = vand.u32 %v1389, 4294901760
    %1391 = vmatmul.mubr.f32.gmra.mrb[0].mxu0 %v1390
    %v1392 = vpop.f32.mrb[0].mxu0
    %v1393 = vadd.f32 0.0, %v1392
    %v1394 = vpop.f32.mrb[0].mxu0
    %1395 = vdwg.mxu0
    %1396 = vmatprep.subr.mxu0 0.0
    %v1397 = vand.u32 %v1300, 4294901760
    %v1398 = vsub.f32 %v1300, %v1397
    %v1399 = vand.u32 %v1398, 4294901760
    %v1400 = vsub.f32 %v1398, %v1399
    %v1401 = vand.u32 %v1400, 4294901760
    %1402 = vmatpush1.msra.mxu0 %v1401
    %1403 = vmatprep.subr.mxu0 0.0
    %v1404 = vand.u32 %v1301, 4294901760
    %v1405 = vsub.f32 %v1301, %v1404
    %v1406 = vand.u32 %v1405, 4294901760
    %v1407 = vsub.f32 %v1405, %v1406
    %v1408 = vand.u32 %v1407, 4294901760
    %1409 = vmatpush1.msra.mxu0 %v1408
    %1410 = vmatprep.subr.mxu0 0.0
    %v1411 = vand.u32 %v1302, 4294901760
    %v1412 = vsub.f32 %v1302, %v1411
    %v1413 = vand.u32 %v1412, 4294901760
    %v1414 = vsub.f32 %v1412, %v1413
    %v1415 = vand.u32 %v1414, 4294901760
    %1416 = vmatpush1.msra.mxu0 %v1415
    %1417 = vmatprep.subr.mxu0 0.0
    %v1418 = vand.u32 %v1303, 4294901760
    %v1419 = vsub.f32 %v1303, %v1418
    %v1420 = vand.u32 %v1419, 4294901760
    %v1421 = vsub.f32 %v1419, %v1420
    %v1422 = vand.u32 %v1421, 4294901760
    %1423 = vmatpush1.msra.mxu0 %v1422
    %1424 = vmatprep.subr.mxu0 0.0
    %v1425 = vand.u32 %v1304, 4294901760
    %v1426 = vsub.f32 %v1304, %v1425
    %v1427 = vand.u32 %v1426, 4294901760
    %v1428 = vsub.f32 %v1426, %v1427
    %v1429 = vand.u32 %v1428, 4294901760
    %1430 = vmatpush1.msra.mxu0 %v1429
    %1431 = vmatprep.subr.mxu0 0.0
    %v1432 = vand.u32 %v1313, 4294901760
    %v1433 = vsub.f32 %v1313, %v1432
    %v1434 = vand.u32 %v1433, 4294901760
    %v1435 = vsub.f32 %v1433, %v1434
    %v1436 = vand.u32 %v1435, 4294901760
    %1437 = vmatpush1.msra.mxu0 %v1436
    %1438 = vmatprep.subr.mxu0 0.0
    %1439 = vmatpush1.msra.mxu0 0.0
    %1440 = vmatprep.subr.mxu0 0.0
    %1441 = vmatpush1.msra.mxu0 0.0
    %1442 = vmatprep.subr.mxu0 0.0
    %1443 = vmatpush1.msra.mxu0 0.0
    %1444 = vmatprep.subr.mxu0 0.0
    %1445 = vmatpush1.msra.mxu0 0.0
    %1446 = vmatprep.subr.mxu0 0.0
    %1447 = vmatpush1.msra.mxu0 0.0
    %1448 = vmatprep.subr.mxu0 0.0
    %1449 = vmatpush1.msra.mxu0 0.0
    %1450 = vmatprep.subr.mxu0 0.0
    %1451 = vmatpush1.msra.mxu0 0.0
    %1452 = vmatprep.subr.mxu0 0.0
    %1453 = vmatpush1.msra.mxu0 0.0
    %1454 = vmatprep.subr.mxu0 0.0
    %1455 = vmatpush1.msra.mxu0 0.0
    %1456 = vmatprep.subr.mxu0 0.0
    %1457 = vmatpush1.msra.mxu0 0.0
    %1458 = vmatprep.subr.mxu0 0.0
    %1459 = vmatpush1.msra.mxu0 0.0
    %1460 = vmatprep.subr.mxu0 0.0
    %1461 = vmatpush1.msra.mxu0 0.0
    %1462 = vmatprep.subr.mxu0 0.0
    %1463 = vmatpush1.msra.mxu0 0.0
    %1464 = vmatprep.subr.mxu0 0.0
    %1465 = vmatpush1.msra.mxu0 0.0
    %1466 = vmatprep.subr.mxu0 0.0
    %1467 = vmatpush1.msra.mxu0 0.0
    %1468 = vmatprep.subr.mxu0 0.0
    %1469 = vmatpush1.msra.mxu0 0.0
    %1470 = vmatprep.subr.mxu0 0.0
    %1471 = vmatpush1.msra.mxu0 0.0
    %1472 = vmatprep.subr.mxu0 0.0
    %1473 = vmatpush1.msra.mxu0 0.0
    %1474 = vmatprep.subr.mxu0 0.0
    %1475 = vmatpush1.msra.mxu0 0.0
    %1476 = vmatprep.subr.mxu0 0.0
    %1477 = vmatpush1.msra.mxu0 0.0
    %1478 = vmatprep.subr.mxu0 0.0
    %1479 = vmatpush1.msra.mxu0 0.0
    %1480 = vmatprep.subr.mxu0 0.0
    %1481 = vmatpush1.msra.mxu0 0.0
    %1482 = vmatprep.subr.mxu0 0.0
    %1483 = vmatpush1.msra.mxu0 0.0
    %1484 = vmatprep.subr.mxu0 0.0
    %1485 = vmatpush1.msra.mxu0 0.0
    %1486 = vmatprep.subr.mxu0 0.0
    %1487 = vmatpush1.msra.mxu0 0.0
    %1488 = vmatprep.subr.mxu0 0.0
    %1489 = vmatpush1.msra.mxu0 0.0
    %1490 = vmatprep.mubr.f32.mxu0 0.0
    %v1491 = vand.u32 %v1310, 4294901760
    %1492 = vmatmul.mubr.f32.gmra.mrb[0].mxu0 %v1491
    %v1493 = vpop.f32.mrb[0].mxu0
    %v1494 = vadd.f32 %v1393, %v1493
    %v1495 = vpop.f32.mrb[0].mxu0
    %1496 = vdwg.mxu0
    %1497 = vmatprep.subr.mxu0 0.0
    %v1498 = vand.u32 %v1300, 4294901760
    %v1499 = vsub.f32 %v1300, %v1498
    %1500 = vmatpush1.msra.mxu0 %v1499
    %1501 = vmatprep.subr.mxu0 0.0
    %v1502 = vand.u32 %v1301, 4294901760
    %v1503 = vsub.f32 %v1301, %v1502
    %1504 = vmatpush1.msra.mxu0 %v1503
    %1505 = vmatprep.subr.mxu0 0.0
    %v1506 = vand.u32 %v1302, 4294901760
    %v1507 = vsub.f32 %v1302, %v1506
    %1508 = vmatpush1.msra.mxu0 %v1507
    %1509 = vmatprep.subr.mxu0 0.0
    %v1510 = vand.u32 %v1303, 4294901760
    %v1511 = vsub.f32 %v1303, %v1510
    %1512 = vmatpush1.msra.mxu0 %v1511
    %1513 = vmatprep.subr.mxu0 0.0
    %v1514 = vand.u32 %v1304, 4294901760
    %v1515 = vsub.f32 %v1304, %v1514
    %1516 = vmatpush1.msra.mxu0 %v1515
    %1517 = vmatprep.subr.mxu0 0.0
    %v1518 = vand.u32 %v1313, 4294901760
    %v1519 = vsub.f32 %v1313, %v1518
    %1520 = vmatpush1.msra.mxu0 %v1519
    %1521 = vmatprep.subr.mxu0 0.0
    %1522 = vmatpush1.msra.mxu0 0.0
    %1523 = vmatprep.subr.mxu0 0.0
    %1524 = vmatpush1.msra.mxu0 0.0
    %1525 = vmatprep.subr.mxu0 0.0
    %1526 = vmatpush1.msra.mxu0 0.0
    %1527 = vmatprep.subr.mxu0 0.0
    %1528 = vmatpush1.msra.mxu0 0.0
    %1529 = vmatprep.subr.mxu0 0.0
    %1530 = vmatpush1.msra.mxu0 0.0
    %1531 = vmatprep.subr.mxu0 0.0
    %1532 = vmatpush1.msra.mxu0 0.0
    %1533 = vmatprep.subr.mxu0 0.0
    %1534 = vmatpush1.msra.mxu0 0.0
    %1535 = vmatprep.subr.mxu0 0.0
    %1536 = vmatpush1.msra.mxu0 0.0
    %1537 = vmatprep.subr.mxu0 0.0
    %1538 = vmatpush1.msra.mxu0 0.0
    %1539 = vmatprep.subr.mxu0 0.0
    %1540 = vmatpush1.msra.mxu0 0.0
    %1541 = vmatprep.subr.mxu0 0.0
    %1542 = vmatpush1.msra.mxu0 0.0
    %1543 = vmatprep.subr.mxu0 0.0
    %1544 = vmatpush1.msra.mxu0 0.0
    %1545 = vmatprep.subr.mxu0 0.0
    %1546 = vmatpush1.msra.mxu0 0.0
    %1547 = vmatprep.subr.mxu0 0.0
    %1548 = vmatpush1.msra.mxu0 0.0
    %1549 = vmatprep.subr.mxu0 0.0
    %1550 = vmatpush1.msra.mxu0 0.0
    %1551 = vmatprep.subr.mxu0 0.0
    %1552 = vmatpush1.msra.mxu0 0.0
    %1553 = vmatprep.subr.mxu0 0.0
    %1554 = vmatpush1.msra.mxu0 0.0
    %1555 = vmatprep.subr.mxu0 0.0
    %1556 = vmatpush1.msra.mxu0 0.0
    %1557 = vmatprep.subr.mxu0 0.0
    %1558 = vmatpush1.msra.mxu0 0.0
    %1559 = vmatprep.subr.mxu0 0.0
    %1560 = vmatpush1.msra.mxu0 0.0
    %1561 = vmatprep.subr.mxu0 0.0
    %1562 = vmatpush1.msra.mxu0 0.0
    %1563 = vmatprep.subr.mxu0 0.0
    %1564 = vmatpush1.msra.mxu0 0.0
    %1565 = vmatprep.subr.mxu0 0.0
    %1566 = vmatpush1.msra.mxu0 0.0
    %1567 = vmatprep.subr.mxu0 0.0
    %1568 = vmatpush1.msra.mxu0 0.0
    %1569 = vmatprep.subr.mxu0 0.0
    %1570 = vmatpush1.msra.mxu0 0.0
    %1571 = vmatprep.subr.mxu0 0.0
    %1572 = vmatpush1.msra.mxu0 0.0
    %1573 = vmatprep.mubr.f32.mxu0 0.0
    %v1574 = vand.u32 %v1310, 4294901760
    %v1575 = vsub.f32 %v1310, %v1574
    %1576 = vmatmul.mubr.f32.gmra.mrb[0].mxu0 %v1575
    %v1577 = vpop.f32.mrb[0].mxu0
    %v1578 = vadd.f32 %v1494, %v1577
    %v1579 = vpop.f32.mrb[0].mxu0
    %1580 = vdwg.mxu0
    %1581 = vmatprep.subr.mxu0 0.0
    %v1582 = vand.u32 %v1300, 4294901760
    %1583 = vmatpush1.msra.mxu0 %v1582
    %1584 = vmatprep.subr.mxu0 0.0
    %v1585 = vand.u32 %v1301, 4294901760
    %1586 = vmatpush1.msra.mxu0 %v1585
    %1587 = vmatprep.subr.mxu0 0.0
    %v1588 = vand.u32 %v1302, 4294901760
    %1589 = vmatpush1.msra.mxu0 %v1588
    %1590 = vmatprep.subr.mxu0 0.0
    %v1591 = vand.u32 %v1303, 4294901760
    %1592 = vmatpush1.msra.mxu0 %v1591
    %1593 = vmatprep.subr.mxu0 0.0
    %v1594 = vand.u32 %v1304, 4294901760
    %1595 = vmatpush1.msra.mxu0 %v1594
    %1596 = vmatprep.subr.mxu0 0.0
    %v1597 = vand.u32 %v1313, 4294901760
    %1598 = vmatpush1.msra.mxu0 %v1597
    %1599 = vmatprep.subr.mxu0 0.0
    %1600 = vmatpush1.msra.mxu0 0.0
    %1601 = vmatprep.subr.mxu0 0.0
    %1602 = vmatpush1.msra.mxu0 0.0
    %1603 = vmatprep.subr.mxu0 0.0
    %1604 = vmatpush1.msra.mxu0 0.0
    %1605 = vmatprep.subr.mxu0 0.0
    %1606 = vmatpush1.msra.mxu0 0.0
    %1607 = vmatprep.subr.mxu0 0.0
    %1608 = vmatpush1.msra.mxu0 0.0
    %1609 = vmatprep.subr.mxu0 0.0
    %1610 = vmatpush1.msra.mxu0 0.0
    %1611 = vmatprep.subr.mxu0 0.0
    %1612 = vmatpush1.msra.mxu0 0.0
    %1613 = vmatprep.subr.mxu0 0.0
    %1614 = vmatpush1.msra.mxu0 0.0
    %1615 = vmatprep.subr.mxu0 0.0
    %1616 = vmatpush1.msra.mxu0 0.0
    %1617 = vmatprep.subr.mxu0 0.0
    %1618 = vmatpush1.msra.mxu0 0.0
    %1619 = vmatprep.subr.mxu0 0.0
    %1620 = vmatpush1.msra.mxu0 0.0
    %1621 = vmatprep.subr.mxu0 0.0
    %1622 = vmatpush1.msra.mxu0 0.0
    %1623 = vmatprep.subr.mxu0 0.0
    %1624 = vmatpush1.msra.mxu0 0.0
    %1625 = vmatprep.subr.mxu0 0.0
    %1626 = vmatpush1.msra.mxu0 0.0
    %1627 = vmatprep.subr.mxu0 0.0
    %1628 = vmatpush1.msra.mxu0 0.0
    %1629 = vmatprep.subr.mxu0 0.0
    %1630 = vmatpush1.msra.mxu0 0.0
    %1631 = vmatprep.subr.mxu0 0.0
    %1632 = vmatpush1.msra.mxu0 0.0
    %1633 = vmatprep.subr.mxu0 0.0
    %1634 = vmatpush1.msra.mxu0 0.0
    %1635 = vmatprep.subr.mxu0 0.0
    %1636 = vmatpush1.msra.mxu0 0.0
    %1637 = vmatprep.subr.mxu0 0.0
    %1638 = vmatpush1.msra.mxu0 0.0
    %1639 = vmatprep.subr.mxu0 0.0
    %1640 = vmatpush1.msra.mxu0 0.0
    %1641 = vmatprep.subr.mxu0 0.0
    %1642 = vmatpush1.msra.mxu0 0.0
    %1643 = vmatprep.subr.mxu0 0.0
    %1644 = vmatpush1.msra.mxu0 0.0
    %1645 = vmatprep.subr.mxu0 0.0
    %1646 = vmatpush1.msra.mxu0 0.0
    %1647 = vmatprep.subr.mxu0 0.0
    %1648 = vmatpush1.msra.mxu0 0.0
    %1649 = vmatprep.subr.mxu0 0.0
    %1650 = vmatpush1.msra.mxu0 0.0
    %1651 = vmatprep.mubr.f32.mxu0 0.0
    %v1652 = vand.u32 %v1310, 4294901760
    %v1653 = vsub.f32 %v1310, %v1652
    %v1654 = vand.u32 %v1653, 4294901760
    %1655 = vmatmul.mubr.f32.gmra.mrb[0].mxu0 %v1654
    %v1656 = vpop.f32.mrb[0].mxu0
    %v1657 = vadd.f32 %v1578, %v1656
    %v1658 = vpop.f32.mrb[0].mxu0
    %1659 = vdwg.mxu0
    %1660 = vmatprep.subr.mxu0 0.0
    %v1661 = vand.u32 %v1300, 4294901760
    %v1662 = vsub.f32 %v1300, %v1661
    %v1663 = vand.u32 %v1662, 4294901760
    %1664 = vmatpush1.msra.mxu0 %v1663
    %1665 = vmatprep.subr.mxu0 0.0
    %v1666 = vand.u32 %v1301, 4294901760
    %v1667 = vsub.f32 %v1301, %v1666
    %v1668 = vand.u32 %v1667, 4294901760
    %1669 = vmatpush1.msra.mxu0 %v1668
    %1670 = vmatprep.subr.mxu0 0.0
    %v1671 = vand.u32 %v1302, 4294901760
    %v1672 = vsub.f32 %v1302, %v1671
    %v1673 = vand.u32 %v1672, 4294901760
    %1674 = vmatpush1.msra.mxu0 %v1673
    %1675 = vmatprep.subr.mxu0 0.0
    %v1676 = vand.u32 %v1303, 4294901760
    %v1677 = vsub.f32 %v1303, %v1676
    %v1678 = vand.u32 %v1677, 4294901760
    %1679 = vmatpush1.msra.mxu0 %v1678
    %1680 = vmatprep.subr.mxu0 0.0
    %v1681 = vand.u32 %v1304, 4294901760
    %v1682 = vsub.f32 %v1304, %v1681
    %v1683 = vand.u32 %v1682, 4294901760
    %1684 = vmatpush1.msra.mxu0 %v1683
    %1685 = vmatprep.subr.mxu0 0.0
    %v1686 = vand.u32 %v1313, 4294901760
    %v1687 = vsub.f32 %v1313, %v1686
    %v1688 = vand.u32 %v1687, 4294901760
    %1689 = vmatpush1.msra.mxu0 %v1688
    %1690 = vmatprep.subr.mxu0 0.0
    %1691 = vmatpush1.msra.mxu0 0.0
    %1692 = vmatprep.subr.mxu0 0.0
    %1693 = vmatpush1.msra.mxu0 0.0
    %1694 = vmatprep.subr.mxu0 0.0
    %1695 = vmatpush1.msra.mxu0 0.0
    %1696 = vmatprep.subr.mxu0 0.0
    %1697 = vmatpush1.msra.mxu0 0.0
    %1698 = vmatprep.subr.mxu0 0.0
    %1699 = vmatpush1.msra.mxu0 0.0
    %1700 = vmatprep.subr.mxu0 0.0
    %1701 = vmatpush1.msra.mxu0 0.0
    %1702 = vmatprep.subr.mxu0 0.0
    %1703 = vmatpush1.msra.mxu0 0.0
    %1704 = vmatprep.subr.mxu0 0.0
    %1705 = vmatpush1.msra.mxu0 0.0
    %1706 = vmatprep.subr.mxu0 0.0
    %1707 = vmatpush1.msra.mxu0 0.0
    %1708 = vmatprep.subr.mxu0 0.0
    %1709 = vmatpush1.msra.mxu0 0.0
    %1710 = vmatprep.subr.mxu0 0.0
    %1711 = vmatpush1.msra.mxu0 0.0
    %1712 = vmatprep.subr.mxu0 0.0
    %1713 = vmatpush1.msra.mxu0 0.0
    %1714 = vmatprep.subr.mxu0 0.0
    %1715 = vmatpush1.msra.mxu0 0.0
    %1716 = vmatprep.subr.mxu0 0.0
    %1717 = vmatpush1.msra.mxu0 0.0
    %1718 = vmatprep.subr.mxu0 0.0
    %1719 = vmatpush1.msra.mxu0 0.0
    %1720 = vmatprep.subr.mxu0 0.0
    %1721 = vmatpush1.msra.mxu0 0.0
    %1722 = vmatprep.subr.mxu0 0.0
    %1723 = vmatpush1.msra.mxu0 0.0
    %1724 = vmatprep.subr.mxu0 0.0
    %1725 = vmatpush1.msra.mxu0 0.0
    %1726 = vmatprep.subr.mxu0 0.0
    %1727 = vmatpush1.msra.mxu0 0.0
    %1728 = vmatprep.subr.mxu0 0.0
    %1729 = vmatpush1.msra.mxu0 0.0
    %1730 = vmatprep.subr.mxu0 0.0
    %1731 = vmatpush1.msra.mxu0 0.0
    %1732 = vmatprep.subr.mxu0 0.0
    %1733 = vmatpush1.msra.mxu0 0.0
    %1734 = vmatprep.subr.mxu0 0.0
    %1735 = vmatpush1.msra.mxu0 0.0
    %1736 = vmatprep.subr.mxu0 0.0
    %1737 = vmatpush1.msra.mxu0 0.0
    %1738 = vmatprep.subr.mxu0 0.0
    %1739 = vmatpush1.msra.mxu0 0.0
    %1740 = vmatprep.subr.mxu0 0.0
    %1741 = vmatpush1.msra.mxu0 0.0
    %1742 = vmatprep.mubr.f32.mxu0 0.0
    %v1743 = vand.u32 %v1310, 4294901760
    %1744 = vmatmul.mubr.f32.gmra.mrb[0].mxu0 %v1743
    %v1745 = vpop.f32.mrb[0].mxu0
    %v1746 = vadd.f32 %v1657, %v1745
    %v1747 = vpop.f32.mrb[0].mxu0
    %1748 = vdwg.mxu0
    %1749 = vmatprep.subr.mxu0 0.0
    %v1750 = vand.u32 %v1300, 4294901760
    %1751 = vmatpush1.msra.mxu0 %v1750
    %1752 = vmatprep.subr.mxu0 0.0
    %v1753 = vand.u32 %v1301, 4294901760
    %1754 = vmatpush1.msra.mxu0 %v1753
    %1755 = vmatprep.subr.mxu0 0.0
    %v1756 = vand.u32 %v1302, 4294901760
    %1757 = vmatpush1.msra.mxu0 %v1756
    %1758 = vmatprep.subr.mxu0 0.0
    %v1759 = vand.u32 %v1303, 4294901760
    %1760 = vmatpush1.msra.mxu0 %v1759
    %1761 = vmatprep.subr.mxu0 0.0
    %v1762 = vand.u32 %v1304, 4294901760
    %1763 = vmatpush1.msra.mxu0 %v1762
    %1764 = vmatprep.subr.mxu0 0.0
    %v1765 = vand.u32 %v1313, 4294901760
    %1766 = vmatpush1.msra.mxu0 %v1765
    %1767 = vmatprep.subr.mxu0 0.0
    %1768 = vmatpush1.msra.mxu0 0.0
    %1769 = vmatprep.subr.mxu0 0.0
    %1770 = vmatpush1.msra.mxu0 0.0
    %1771 = vmatprep.subr.mxu0 0.0
    %1772 = vmatpush1.msra.mxu0 0.0
    %1773 = vmatprep.subr.mxu0 0.0
    %1774 = vmatpush1.msra.mxu0 0.0
    %1775 = vmatprep.subr.mxu0 0.0
    %1776 = vmatpush1.msra.mxu0 0.0
    %1777 = vmatprep.subr.mxu0 0.0
    %1778 = vmatpush1.msra.mxu0 0.0
    %1779 = vmatprep.subr.mxu0 0.0
    %1780 = vmatpush1.msra.mxu0 0.0
    %1781 = vmatprep.subr.mxu0 0.0
    %1782 = vmatpush1.msra.mxu0 0.0
    %1783 = vmatprep.subr.mxu0 0.0
    %1784 = vmatpush1.msra.mxu0 0.0
    %1785 = vmatprep.subr.mxu0 0.0
    %1786 = vmatpush1.msra.mxu0 0.0
    %1787 = vmatprep.subr.mxu0 0.0
    %1788 = vmatpush1.msra.mxu0 0.0
    %1789 = vmatprep.subr.mxu0 0.0
    %1790 = vmatpush1.msra.mxu0 0.0
    %1791 = vmatprep.subr.mxu0 0.0
    %1792 = vmatpush1.msra.mxu0 0.0
    %1793 = vmatprep.subr.mxu0 0.0
    %1794 = vmatpush1.msra.mxu0 0.0
    %1795 = vmatprep.subr.mxu0 0.0
    %1796 = vmatpush1.msra.mxu0 0.0
    %1797 = vmatprep.subr.mxu0 0.0
    %1798 = vmatpush1.msra.mxu0 0.0
    %1799 = vmatprep.subr.mxu0 0.0
    %1800 = vmatpush1.msra.mxu0 0.0
    %1801 = vmatprep.subr.mxu0 0.0
    %1802 = vmatpush1.msra.mxu0 0.0
    %1803 = vmatprep.subr.mxu0 0.0
    %1804 = vmatpush1.msra.mxu0 0.0
    %1805 = vmatprep.subr.mxu0 0.0
    %1806 = vmatpush1.msra.mxu0 0.0
    %1807 = vmatprep.subr.mxu0 0.0
    %1808 = vmatpush1.msra.mxu0 0.0
    %1809 = vmatprep.subr.mxu0 0.0
    %1810 = vmatpush1.msra.mxu0 0.0
    %1811 = vmatprep.subr.mxu0 0.0
    %1812 = vmatpush1.msra.mxu0 0.0
    %1813 = vmatprep.subr.mxu0 0.0
    %1814 = vmatpush1.msra.mxu0 0.0
    %1815 = vmatprep.subr.mxu0 0.0
    %1816 = vmatpush1.msra.mxu0 0.0
    %1817 = vmatprep.subr.mxu0 0.0
    %1818 = vmatpush1.msra.mxu0 0.0
    %1819 = vmatprep.mubr.f32.mxu0 0.0
    %v1820 = vand.u32 %v1310, 4294901760
    %1821 = vmatmul.mubr.f32.gmra.mrb[0].mxu0 %v1820
    %v1822 = vpop.f32.mrb[0].mxu0
    %v1823 = vadd.f32 %v1746, %v1822
    %v1824 = vpop.f32.mrb[0].mxu0
    %1825 = vdwg.mxu0
    %1826 = vst [vmem:[#allocation5] sm:$0x1] %v1823
    // Predicated region
    $region14: #{tpu_custom_call.1} parent=1 // pred_check
      _
    $region15: #{tpu_custom_call.1} parent=1 // pred_check_branch
      %1828 = sbr.rel (0) target = $region17
    $region16: #{tpu_custom_call.1} parent=1 // pred_region
      %s1830 = ssub.s32 16, 16
      %1831 = vsyncadd [#allocation4], %s1830
      %s1833 = sshll.u32 [#allocation5], 4
      %s1834 = int_to_ptr.vmem [resolvable:$true] %s1833
      %1836 = dma.vmem_to_hbm [thread:$0]  %s1834, 16, %s2, [#allocation4]
    $region17: #{tpu_custom_call.1} parent=1 // pred_fallthru
      _
    // Predicated region
    $region18: #{tpu_custom_call.1} parent=1 // pred_check
      _
    $region19: #{tpu_custom_call.1} parent=1 // pred_check_branch
      %1838 = sbr.rel (0) target = $region21
    $region20: #{tpu_custom_call.1} parent=1 // pred_region
      %1839 = dma.done [#allocation4], 16
    $region21: #{tpu_custom_call.1} parent=1 // pred_fallthru
      _
    %1840 = vsyncpa [#allocation3], 1
    %1841 = vsyncpa [#allocation4], 1

</llo_original>
